<compile_context>
chip_gen: v7x
topology: tpu7x:2x2x1
jax: 0.10.0
libtpu: 0.0.40
codegen_flags: <defaults>
</compile_context>

<pallas_src>
import functools

import jax
import jax.numpy as jnp
from jax.experimental import pallas as pl
from jax.experimental.pallas import tpu as pltpu


FEATURE_DIM = 15
HIDDEN_DIM = 400
HIDDEN_LAYER_NUM = 3
OUTPUT_DIM = 4


def _round_up(n, m):
    return ((n + m - 1) // m) * m


def mlp_kernel(x_ref,
               w1_ref, b1_ref,
               wh1_ref, bh1_ref,
               wh2_ref, bh2_ref,
               wh3_ref, bh3_ref,
               wp_ref, bp_ref,
               o_ref):
    # first_layer + ReLU  (bf16 MXU inputs, f32 accumulate, f32 bias+ReLU)
    h = jnp.dot(x_ref[...].astype(jnp.bfloat16), w1_ref[...],
                preferred_element_type=jnp.float32)
    h = jnp.maximum(h + b1_ref[...], 0.0)

    # hidden layers + ReLU
    for w_ref, b_ref in ((wh1_ref, bh1_ref), (wh2_ref, bh2_ref), (wh3_ref, bh3_ref)):
        h = jnp.dot(h.astype(jnp.bfloat16), w_ref[...],
                    preferred_element_type=jnp.float32)
        h = jnp.maximum(h + b_ref[...], 0.0)

    # predict (no activation)
    out = jnp.dot(h.astype(jnp.bfloat16), wp_ref[...],
                  preferred_element_type=jnp.float32) + bp_ref[...]
    o_ref[...] = out.astype(o_ref.dtype)


@functools.partial(jax.jit, static_argnames=("tile_b",))
def _mlp_forward_padded(x_padded, flat_params, tile_b):
    padded_batch = x_padded.shape[0]
    grid = (padded_batch // tile_b,)

    in_specs = [pl.BlockSpec((tile_b, FEATURE_DIM), lambda i: (i, 0))]
    flat_args = [x_padded]
    for p in flat_params:
        flat_args.append(p)
        # Full-shape block, constant index -> stays VMEM-resident across steps.
        in_specs.append(pl.BlockSpec(p.shape, lambda i: (0, 0)))

    return pl.pallas_call(
        mlp_kernel,
        out_shape=jax.ShapeDtypeStruct((padded_batch, OUTPUT_DIM), jnp.float32),
        grid=grid,
        in_specs=in_specs,
        out_specs=pl.BlockSpec((tile_b, OUTPUT_DIM), lambda i: (i, 0)),
        compiler_params=pltpu.CompilerParams(
            dimension_semantics=("parallel",),        # v7x: shard batch over 2 TCs
            vmem_limit_bytes=64 * 1024 * 1024,
        ),
    )(*flat_args)


def mlp_forward(x, params, tile_b=None):
    """x: (batch, 15) f32. params: list of (W, b), W (in,out) bf16, b (1,out) f32."""
    batch = x.shape[0]
    if tile_b is None:
        # 256 rows fills the MXU M dimension; small demo batches just use one tile.
        tile_b = min(256, _round_up(batch, 8))
    padded_batch = _round_up(batch, tile_b)
    if padded_batch != batch:
        x = jnp.pad(x, ((0, padded_batch - batch), (0, 0)))

    flat_params = []
    for w, b in params:
        flat_params.append(w)
        flat_params.append(b)

    out = _mlp_forward_padded(x, tuple(flat_params), tile_b)
    return out[:batch]


def init_params(key):
    """Deterministic init mimicking PyTorch's default Linear init
    (U(-1/sqrt(fan_in), +1/sqrt(fan_in))). Weights stored bf16 (in,out); biases f32 (1,out)."""
    dims = [(FEATURE_DIM, HIDDEN_DIM)]
    dims += [(HIDDEN_DIM, HIDDEN_DIM)] * HIDDEN_LAYER_NUM
    dims += [(HIDDEN_DIM, OUTPUT_DIM)]

    params = []
    for (in_dim, out_dim) in dims:
        key, kw, kb = jax.random.split(key, 3)
        bound = 1.0 / jnp.sqrt(jnp.float32(in_dim))
        w = jax.random.uniform(kw, (in_dim, out_dim), jnp.float32, -bound, bound)
        b = jax.random.uniform(kb, (1, out_dim), jnp.float32, -bound, bound)
        params.append((w.astype(jnp.bfloat16), b))
    return params


def reference_forward(x, params):
    """Pure-JAX reference mirroring the kernel's numerics (bf16 MXU inputs, f32 accumulate)."""
    h = x
    for i, (w, b) in enumerate(params):
        h = jnp.dot(h.astype(jnp.bfloat16), w,
                    preferred_element_type=jnp.float32) + b
        if i < len(params) - 1:
            h = jnp.maximum(h, 0.0)
    return h


if __name__ == "__main__":
    key = jax.random.PRNGKey(0)
    key, kx = jax.random.split(key)

    batch = 16
    x = jax.random.normal(kx, (batch, FEATURE_DIM), jnp.float32)
    params = init_params(key)

    out = mlp_forward(x, params)
    out = jax.block_until_ready(out)

    ref = reference_forward(x, params)
    assert out.shape == (batch, OUTPUT_DIM), out.shape
    assert jnp.allclose(out, ref, atol=2e-2, rtol=2e-2), "mismatch vs pure-JAX reference"

    print("KERNEL_OK")
</pallas_src>

<mosaic_0001>
module attributes {stable_mosaic.version = 11 : i64} {
  func.func @mlp_kernel(%arg0: i32, %arg1: memref<16x15xf32, #tpu.memory_space<vmem>>, %arg2: memref<15x400xbf16, #tpu.memory_space<vmem>>, %arg3: memref<1x400xf32, #tpu.memory_space<vmem>>, %arg4: memref<400x400xbf16, #tpu.memory_space<vmem>>, %arg5: memref<1x400xf32, #tpu.memory_space<vmem>>, %arg6: memref<400x400xbf16, #tpu.memory_space<vmem>>, %arg7: memref<1x400xf32, #tpu.memory_space<vmem>>, %arg8: memref<400x400xbf16, #tpu.memory_space<vmem>>, %arg9: memref<1x400xf32, #tpu.memory_space<vmem>>, %arg10: memref<400x4xbf16, #tpu.memory_space<vmem>>, %arg11: memref<1x4xf32, #tpu.memory_space<vmem>>, %arg12: memref<16x4xf32, #tpu.memory_space<vmem>>) attributes {dimension_semantics = [#tpu.dimension_semantics<parallel>], iteration_bounds = array<i64: 1>, scalar_prefetch = 0 : i64, scratch_operands = 0 : i64, tpu.core_type = #tpu.core_type<tc>, window_params = [{transform_indices = @transform_0, window_bounds = array<i64: 16, 15>}, {pipeline_mode = #tpu.pipeline_mode<synchronous>, transform_indices = @transform_1, window_bounds = array<i64: 15, 400>}, {pipeline_mode = #tpu.pipeline_mode<synchronous>, transform_indices = @transform_2, window_bounds = array<i64: 1, 400>}, {pipeline_mode = #tpu.pipeline_mode<synchronous>, transform_indices = @transform_3, window_bounds = array<i64: 400, 400>}, {pipeline_mode = #tpu.pipeline_mode<synchronous>, transform_indices = @transform_4, window_bounds = array<i64: 1, 400>}, {pipeline_mode = #tpu.pipeline_mode<synchronous>, transform_indices = @transform_5, window_bounds = array<i64: 400, 400>}, {pipeline_mode = #tpu.pipeline_mode<synchronous>, transform_indices = @transform_6, window_bounds = array<i64: 1, 400>}, {pipeline_mode = #tpu.pipeline_mode<synchronous>, transform_indices = @transform_7, window_bounds = array<i64: 400, 400>}, {pipeline_mode = #tpu.pipeline_mode<synchronous>, transform_indices = @transform_8, window_bounds = array<i64: 1, 400>}, {pipeline_mode = #tpu.pipeline_mode<synchronous>, transform_indices = @transform_9, window_bounds = array<i64: 400, 4>}, {pipeline_mode = #tpu.pipeline_mode<synchronous>, transform_indices = @transform_10, window_bounds = array<i64: 1, 4>}, {transform_indices = @transform_11, window_bounds = array<i64: 16, 4>}]} {
    %c0 = arith.constant 0 : index
    %c0_0 = arith.constant 0 : index
    %0 = vector.load %arg1[%c0, %c0_0] : memref<16x15xf32, #tpu.memory_space<vmem>>, vector<16x15xf32>
    %1 = arith.truncf %0 : vector<16x15xf32> to vector<16x15xbf16>
    %c0_1 = arith.constant 0 : index
    %c0_2 = arith.constant 0 : index
    %2 = vector.load %arg2[%c0_1, %c0_2] : memref<15x400xbf16, #tpu.memory_space<vmem>>, vector<15x400xbf16>
    %cst = arith.constant dense<0.000000e+00> : vector<16x400xf32>
    %3 = tpu.matmul %1, %2, %cst {dimension_numbers = #tpu.dot_dimension_numbers<[1], [0], [0], [1], [0, 0, 1, 1], [], []>} : vector<16x15xbf16>, vector<15x400xbf16>, vector<16x400xf32> -> vector<16x400xf32>
    %c0_3 = arith.constant 0 : index
    %c0_4 = arith.constant 0 : index
    %4 = vector.load %arg3[%c0_3, %c0_4] : memref<1x400xf32, #tpu.memory_space<vmem>>, vector<1x400xf32>
    %5 = vector.broadcast %4 : vector<1x400xf32> to vector<16x400xf32>
    %6 = arith.addf %3, %5 : vector<16x400xf32>
    %cst_5 = arith.constant 0.000000e+00 : f32
    %7 = vector.broadcast %cst_5 : f32 to vector<16x400xf32>
    %8 = arith.maximumf %6, %7 : vector<16x400xf32>
    %9 = arith.truncf %8 : vector<16x400xf32> to vector<16x400xbf16>
    %c0_6 = arith.constant 0 : index
    %c0_7 = arith.constant 0 : index
    %10 = vector.load %arg4[%c0_6, %c0_7] : memref<400x400xbf16, #tpu.memory_space<vmem>>, vector<400x400xbf16>
    %cst_8 = arith.constant dense<0.000000e+00> : vector<16x400xf32>
    %11 = tpu.matmul %9, %10, %cst_8 {dimension_numbers = #tpu.dot_dimension_numbers<[1], [0], [0], [1], [0, 0, 1, 1], [], []>} : vector<16x400xbf16>, vector<400x400xbf16>, vector<16x400xf32> -> vector<16x400xf32>
    %c0_9 = arith.constant 0 : index
    %c0_10 = arith.constant 0 : index
    %12 = vector.load %arg5[%c0_9, %c0_10] : memref<1x400xf32, #tpu.memory_space<vmem>>, vector<1x400xf32>
    %13 = vector.broadcast %12 : vector<1x400xf32> to vector<16x400xf32>
    %14 = arith.addf %11, %13 : vector<16x400xf32>
    %cst_11 = arith.constant 0.000000e+00 : f32
    %15 = vector.broadcast %cst_11 : f32 to vector<16x400xf32>
    %16 = arith.maximumf %14, %15 : vector<16x400xf32>
    %17 = arith.truncf %16 : vector<16x400xf32> to vector<16x400xbf16>
    %c0_12 = arith.constant 0 : index
    %c0_13 = arith.constant 0 : index
    %18 = vector.load %arg6[%c0_12, %c0_13] : memref<400x400xbf16, #tpu.memory_space<vmem>>, vector<400x400xbf16>
    %cst_14 = arith.constant dense<0.000000e+00> : vector<16x400xf32>
    %19 = tpu.matmul %17, %18, %cst_14 {dimension_numbers = #tpu.dot_dimension_numbers<[1], [0], [0], [1], [0, 0, 1, 1], [], []>} : vector<16x400xbf16>, vector<400x400xbf16>, vector<16x400xf32> -> vector<16x400xf32>
    %c0_15 = arith.constant 0 : index
    %c0_16 = arith.constant 0 : index
    %20 = vector.load %arg7[%c0_15, %c0_16] : memref<1x400xf32, #tpu.memory_space<vmem>>, vector<1x400xf32>
    %21 = vector.broadcast %20 : vector<1x400xf32> to vector<16x400xf32>
    %22 = arith.addf %19, %21 : vector<16x400xf32>
    %cst_17 = arith.constant 0.000000e+00 : f32
    %23 = vector.broadcast %cst_17 : f32 to vector<16x400xf32>
    %24 = arith.maximumf %22, %23 : vector<16x400xf32>
    %25 = arith.truncf %24 : vector<16x400xf32> to vector<16x400xbf16>
    %c0_18 = arith.constant 0 : index
    %c0_19 = arith.constant 0 : index
    %26 = vector.load %arg8[%c0_18, %c0_19] : memref<400x400xbf16, #tpu.memory_space<vmem>>, vector<400x400xbf16>
    %cst_20 = arith.constant dense<0.000000e+00> : vector<16x400xf32>
    %27 = tpu.matmul %25, %26, %cst_20 {dimension_numbers = #tpu.dot_dimension_numbers<[1], [0], [0], [1], [0, 0, 1, 1], [], []>} : vector<16x400xbf16>, vector<400x400xbf16>, vector<16x400xf32> -> vector<16x400xf32>
    %c0_21 = arith.constant 0 : index
    %c0_22 = arith.constant 0 : index
    %28 = vector.load %arg9[%c0_21, %c0_22] : memref<1x400xf32, #tpu.memory_space<vmem>>, vector<1x400xf32>
    %29 = vector.broadcast %28 : vector<1x400xf32> to vector<16x400xf32>
    %30 = arith.addf %27, %29 : vector<16x400xf32>
    %cst_23 = arith.constant 0.000000e+00 : f32
    %31 = vector.broadcast %cst_23 : f32 to vector<16x400xf32>
    %32 = arith.maximumf %30, %31 : vector<16x400xf32>
    %33 = arith.truncf %32 : vector<16x400xf32> to vector<16x400xbf16>
    %c0_24 = arith.constant 0 : index
    %c0_25 = arith.constant 0 : index
    %34 = vector.load %arg10[%c0_24, %c0_25] : memref<400x4xbf16, #tpu.memory_space<vmem>>, vector<400x4xbf16>
    %cst_26 = arith.constant dense<0.000000e+00> : vector<16x4xf32>
    %35 = tpu.matmul %33, %34, %cst_26 {dimension_numbers = #tpu.dot_dimension_numbers<[1], [0], [0], [1], [0, 0, 1, 1], [], []>} : vector<16x400xbf16>, vector<400x4xbf16>, vector<16x4xf32> -> vector<16x4xf32>
    %c0_27 = arith.constant 0 : index
    %c0_28 = arith.constant 0 : index
    %36 = vector.load %arg11[%c0_27, %c0_28] : memref<1x4xf32, #tpu.memory_space<vmem>>, vector<1x4xf32>
    %37 = vector.broadcast %36 : vector<1x4xf32> to vector<16x4xf32>
    %38 = arith.addf %35, %37 : vector<16x4xf32>
    %c0_29 = arith.constant 0 : index
    %c0_30 = arith.constant 0 : index
    %39 = vector.load %arg12[%c0_29, %c0_30] : memref<16x4xf32, #tpu.memory_space<vmem>>, vector<16x4xf32>
    tpu.vector_store %arg12[%c0_29, %c0_30], %38 {strides = array<i32>} : memref<16x4xf32, #tpu.memory_space<vmem>>, vector<16x4xf32>,
    return
  }
  func.func @transform_0(%arg0: i32) -> (i32, i32) {
    %c0_i32 = arith.constant 0 : i32
    %c0_i32_0 = arith.constant 0 : i32
    return %arg0, %c0_i32 : i32, i32
  }
  func.func @transform_1(%arg0: i32) -> (i32, i32) {
    %c0_i32 = arith.constant 0 : i32
    %c0_i32_0 = arith.constant 0 : i32
    %c0_i32_1 = arith.constant 0 : i32
    return %c0_i32, %c0_i32_0 : i32, i32
  }
  func.func @transform_2(%arg0: i32) -> (i32, i32) {
    %c0_i32 = arith.constant 0 : i32
    %c0_i32_0 = arith.constant 0 : i32
    %c0_i32_1 = arith.constant 0 : i32
    return %c0_i32, %c0_i32_0 : i32, i32
  }
  func.func @transform_3(%arg0: i32) -> (i32, i32) {
    %c0_i32 = arith.constant 0 : i32
    %c0_i32_0 = arith.constant 0 : i32
    %c0_i32_1 = arith.constant 0 : i32
    return %c0_i32, %c0_i32_0 : i32, i32
  }
  func.func @transform_4(%arg0: i32) -> (i32, i32) {
    %c0_i32 = arith.constant 0 : i32
    %c0_i32_0 = arith.constant 0 : i32
    %c0_i32_1 = arith.constant 0 : i32
    return %c0_i32, %c0_i32_0 : i32, i32
  }
  func.func @transform_5(%arg0: i32) -> (i32, i32) {
    %c0_i32 = arith.constant 0 : i32
    %c0_i32_0 = arith.constant 0 : i32
    %c0_i32_1 = arith.constant 0 : i32
    return %c0_i32, %c0_i32_0 : i32, i32
  }
  func.func @transform_6(%arg0: i32) -> (i32, i32) {
    %c0_i32 = arith.constant 0 : i32
    %c0_i32_0 = arith.constant 0 : i32
    %c0_i32_1 = arith.constant 0 : i32
    return %c0_i32, %c0_i32_0 : i32, i32
  }
  func.func @transform_7(%arg0: i32) -> (i32, i32) {
    %c0_i32 = arith.constant 0 : i32
    %c0_i32_0 = arith.constant 0 : i32
    %c0_i32_1 = arith.constant 0 : i32
    return %c0_i32, %c0_i32_0 : i32, i32
  }
  func.func @transform_8(%arg0: i32) -> (i32, i32) {
    %c0_i32 = arith.constant 0 : i32
    %c0_i32_0 = arith.constant 0 : i32
    %c0_i32_1 = arith.constant 0 : i32
    return %c0_i32, %c0_i32_0 : i32, i32
  }
  func.func @transform_9(%arg0: i32) -> (i32, i32) {
    %c0_i32 = arith.constant 0 : i32
    %c0_i32_0 = arith.constant 0 : i32
    %c0_i32_1 = arith.constant 0 : i32
    return %c0_i32, %c0_i32_0 : i32, i32
  }
  func.func @transform_10(%arg0: i32) -> (i32, i32) {
    %c0_i32 = arith.constant 0 : i32
    %c0_i32_0 = arith.constant 0 : i32
    %c0_i32_1 = arith.constant 0 : i32
    return %c0_i32, %c0_i32_0 : i32, i32
  }
  func.func @transform_11(%arg0: i32) -> (i32, i32) {
    %c0_i32 = arith.constant 0 : i32
    %c0_i32_0 = arith.constant 0 : i32
    return %arg0, %c0_i32 : i32, i32
  }
}

</mosaic_0001>

<llo_original>
// kernel: _mlp_forward_padded.1
$region0: #{_mlp_forward_padded.1}
  #allocation0 [shape = 'u32[]', space=smem, size = 0x4, offset = 0x4, fixed_abs, tag = 'smem constant byte address 0x4 - core index']
  #allocation1 [shape = 'u32[144,128]{1,0:T(1,128)}', space=vmem, size = 0x12000, scoped, tag = 'internal scratch']
  %s0 = inlined_call_operand.hbm [shape: f32[16,15], index: 0, kind: input, shape index: {}]
  %s1 = inlined_call_operand.hbm [shape: bf16[15,400], index: 1, kind: input, shape index: {}]
  %s2 = inlined_call_operand.hbm [shape: f32[1,400], index: 2, kind: input, shape index: {}]
  %s3 = inlined_call_operand.hbm [shape: bf16[400,400], index: 3, kind: input, shape index: {}]
  %s4 = inlined_call_operand.hbm [shape: f32[1,400], index: 4, kind: input, shape index: {}]
  %s5 = inlined_call_operand.hbm [shape: bf16[400,400], index: 5, kind: input, shape index: {}]
  %s6 = inlined_call_operand.hbm [shape: f32[1,400], index: 6, kind: input, shape index: {}]
  %s7 = inlined_call_operand.hbm [shape: bf16[400,400], index: 7, kind: input, shape index: {}]
  %s8 = inlined_call_operand.hbm [shape: f32[1,400], index: 8, kind: input, shape index: {}]
  %s9 = inlined_call_operand.hbm [shape: bf16[400,4], index: 9, kind: input, shape index: {}]
  %s10 = inlined_call_operand.hbm [shape: f32[1,4], index: 10, kind: input, shape index: {}]
  %s11 = inlined_call_operand.hbm [shape: f32[16,4], index: 11, kind: output, shape index: {}]
  %s12 = sld [smem:[#allocation0]]
  $region98: #{_mlp_forward_padded.1} parent=0
    _
  %s14 = ssub.s32 1, %s12
  %s15 = scalar_select 0, %s14, %s12
  $region1: #{_mlp_forward_padded.1} parent=0
    #allocation2 [shape = 'u8[8192]{0}', space=vmem, size = 0x2000, scoped, tag = 'input window, operand 0, single buffered']
    #allocation3 [shape = 's32[1]{0}', space=sflag, size = 0x4, scoped, tag = 'scoped memory for _mlp_forward_padded.1']
    #allocation4 [shape = 's32[1]{0}', space=sflag, size = 0x4, scoped, tag = 'scoped memory for _mlp_forward_padded.1']
    #allocation5 [shape = 'u8[16384]{0}', space=vmem, size = 0x4000, scoped, tag = 'input window, operand 1, single buffered']
    #allocation6 [shape = 's32[1]{0}', space=sflag, size = 0x4, scoped, tag = 'scoped memory for _mlp_forward_padded.1']
    #allocation7 [shape = 'u8[2048]{0}', space=vmem, size = 0x800, scoped, tag = 'input window, operand 2, single buffered']
    #allocation8 [shape = 'u8[409600]{0}', space=vmem, size = 0x64000, scoped, tag = 'input window, operand 3, single buffered']
    #allocation9 [shape = 's32[1]{0}', space=sflag, size = 0x4, scoped, tag = 'scoped memory for _mlp_forward_padded.1']
    #allocation10 [shape = 'u8[2048]{0}', space=vmem, size = 0x800, scoped, tag = 'input window, operand 4, single buffered']
    #allocation11 [shape = 'u8[409600]{0}', space=vmem, size = 0x64000, scoped, tag = 'input window, operand 5, single buffered']
    #allocation12 [shape = 's32[1]{0}', space=sflag, size = 0x4, scoped, tag = 'scoped memory for _mlp_forward_padded.1']
    #allocation13 [shape = 'u8[2048]{0}', space=vmem, size = 0x800, scoped, tag = 'input window, operand 6, single buffered']
    #allocation14 [shape = 'u8[409600]{0}', space=vmem, size = 0x64000, scoped, tag = 'input window, operand 7, single buffered']
    #allocation15 [shape = 's32[1]{0}', space=sflag, size = 0x4, scoped, tag = 'scoped memory for _mlp_forward_padded.1']
    #allocation16 [shape = 'u8[2048]{0}', space=vmem, size = 0x800, scoped, tag = 'input window, operand 8, single buffered']
    #allocation17 [shape = 'u8[102400]{0}', space=vmem, size = 0x19000, scoped, tag = 'input window, operand 9, single buffered']
    #allocation18 [shape = 's32[1]{0}', space=sflag, size = 0x4, scoped, tag = 'scoped memory for _mlp_forward_padded.1']
    #allocation19 [shape = 'u8[512]{0}', space=vmem, size = 0x400, scoped, tag = 'input window, operand 10, single buffered']
    #allocation20 [shape = 'u8[8192]{0}', space=vmem, size = 0x2000, scoped, tag = 'output window, operand 0, single buffered']
    %16 = vsyncpa [#allocation3], 0
    %17 = vsyncpa [#allocation6], 0
    %18 = vsyncpa [#allocation9], 0
    %19 = vsyncpa [#allocation12], 0
    %20 = vsyncpa [#allocation15], 0
    %21 = vsyncpa [#allocation18], 0
    %22 = vsyncpa [#allocation4], 0
    // Predicated region
    $region2: #{_mlp_forward_padded.1} parent=1 // pred_check
      _
    $region3: #{_mlp_forward_padded.1} parent=1 // pred_check_branch
      %24 = sbr.rel (0) target = $region5
    $region4: #{_mlp_forward_padded.1} parent=1 // pred_region
      %s26 = ssub.s32 256, 256
      %27 = vsyncadd [#allocation3], %s26
      %s28 = sshll.u32 [#allocation2], 4
      %s29 = int_to_ptr.vmem [resolvable:$true] %s28
      %34 = dma.hbm_to_vmem [thread:$0]  %s0, 256, %s29, [#allocation3], 128, 128, 8
    $region5: #{_mlp_forward_padded.1} parent=1 // pred_fallthru
      _
    // Predicated region
    $region6: #{_mlp_forward_padded.1} parent=1 // pred_check
      _
    $region7: #{_mlp_forward_padded.1} parent=1 // pred_check_branch
      %36 = sbr.rel (0) target = $region9
    $region8: #{_mlp_forward_padded.1} parent=1 // pred_region
      %s38 = ssub.s32 512, 512
      %39 = vsyncadd [#allocation6], %s38
      %s40 = sshll.u32 [#allocation5], 4
      %s41 = int_to_ptr.vmem [resolvable:$true] %s40
      %46 = dma.hbm_to_vmem [thread:$0]  %s1, 512, %s41, [#allocation6], 256, 256, 16
    $region9: #{_mlp_forward_padded.1} parent=1 // pred_fallthru
      _
    // Predicated region
    $region10: #{_mlp_forward_padded.1} parent=1 // pred_check
      _
    $region11: #{_mlp_forward_padded.1} parent=1 // pred_check_branch
      %48 = sbr.rel (0) target = $region13
    $region12: #{_mlp_forward_padded.1} parent=1 // pred_region
      %s50 = ssub.s32 64, 64
      %51 = vsyncadd [#allocation6], %s50
      %s53 = sshll.u32 [#allocation7], 4
      %s54 = int_to_ptr.vmem [resolvable:$true] %s53
      %56 = dma.hbm_to_vmem [thread:$0]  %s2, 64, %s54, [#allocation6]
    $region13: #{_mlp_forward_padded.1} parent=1 // pred_fallthru
      _
    // Predicated region
    $region14: #{_mlp_forward_padded.1} parent=1 // pred_check
      _
    $region15: #{_mlp_forward_padded.1} parent=1 // pred_check_branch
      %58 = sbr.rel (0) target = $region17
    $region16: #{_mlp_forward_padded.1} parent=1 // pred_region
      %s60 = ssub.s32 12800, 12800
      %61 = vsyncadd [#allocation9], %s60
      %s62 = sshll.u32 [#allocation8], 4
      %s63 = int_to_ptr.vmem [resolvable:$true] %s62
      %68 = dma.hbm_to_vmem [thread:$0]  %s3, 12800, %s63, [#allocation9], 256, 256, 16
    $region17: #{_mlp_forward_padded.1} parent=1 // pred_fallthru
      _
    // Predicated region
    $region18: #{_mlp_forward_padded.1} parent=1 // pred_check
      _
    $region19: #{_mlp_forward_padded.1} parent=1 // pred_check_branch
      %70 = sbr.rel (0) target = $region21
    $region20: #{_mlp_forward_padded.1} parent=1 // pred_region
      %s72 = ssub.s32 64, 64
      %73 = vsyncadd [#allocation9], %s72
      %s75 = sshll.u32 [#allocation10], 4
      %s76 = int_to_ptr.vmem [resolvable:$true] %s75
      %78 = dma.hbm_to_vmem [thread:$0]  %s4, 64, %s76, [#allocation9]
    $region21: #{_mlp_forward_padded.1} parent=1 // pred_fallthru
      _
    // Predicated region
    $region22: #{_mlp_forward_padded.1} parent=1 // pred_check
      _
    $region23: #{_mlp_forward_padded.1} parent=1 // pred_check_branch
      %80 = sbr.rel (0) target = $region25
    $region24: #{_mlp_forward_padded.1} parent=1 // pred_region
      %s82 = ssub.s32 12800, 12800
      %83 = vsyncadd [#allocation12], %s82
      %s84 = sshll.u32 [#allocation11], 4
      %s85 = int_to_ptr.vmem [resolvable:$true] %s84
      %90 = dma.hbm_to_vmem [thread:$0]  %s5, 12800, %s85, [#allocation12], 256, 256, 16
    $region25: #{_mlp_forward_padded.1} parent=1 // pred_fallthru
      _
    // Predicated region
    $region26: #{_mlp_forward_padded.1} parent=1 // pred_check
      _
    $region27: #{_mlp_forward_padded.1} parent=1 // pred_check_branch
      %92 = sbr.rel (0) target = $region29
    $region28: #{_mlp_forward_padded.1} parent=1 // pred_region
      %s94 = ssub.s32 64, 64
      %95 = vsyncadd [#allocation12], %s94
      %s97 = sshll.u32 [#allocation13], 4
      %s98 = int_to_ptr.vmem [resolvable:$true] %s97
      %100 = dma.hbm_to_vmem [thread:$0]  %s6, 64, %s98, [#allocation12]
    $region29: #{_mlp_forward_padded.1} parent=1 // pred_fallthru
      _
    // Predicated region
    $region30: #{_mlp_forward_padded.1} parent=1 // pred_check
      _
    $region31: #{_mlp_forward_padded.1} parent=1 // pred_check_branch
      %102 = sbr.rel (0) target = $region33
    $region32: #{_mlp_forward_padded.1} parent=1 // pred_region
      %s104 = ssub.s32 12800, 12800
      %105 = vsyncadd [#allocation15], %s104
      %s106 = sshll.u32 [#allocation14], 4
      %s107 = int_to_ptr.vmem [resolvable:$true] %s106
      %112 = dma.hbm_to_vmem [thread:$0]  %s7, 12800, %s107, [#allocation15], 256, 256, 16
    $region33: #{_mlp_forward_padded.1} parent=1 // pred_fallthru
      _
    // Predicated region
    $region34: #{_mlp_forward_padded.1} parent=1 // pred_check
      _
    $region35: #{_mlp_forward_padded.1} parent=1 // pred_check_branch
      %114 = sbr.rel (0) target = $region37
    $region36: #{_mlp_forward_padded.1} parent=1 // pred_region
      %s116 = ssub.s32 64, 64
      %117 = vsyncadd [#allocation15], %s116
      %s119 = sshll.u32 [#allocation16], 4
      %s120 = int_to_ptr.vmem [resolvable:$true] %s119
      %122 = dma.hbm_to_vmem [thread:$0]  %s8, 64, %s120, [#allocation15]
    $region37: #{_mlp_forward_padded.1} parent=1 // pred_fallthru
      _
    // Predicated region
    $region38: #{_mlp_forward_padded.1} parent=1 // pred_check
      _
    $region39: #{_mlp_forward_padded.1} parent=1 // pred_check_branch
      %124 = sbr.rel (0) target = $region41
    $region40: #{_mlp_forward_padded.1} parent=1 // pred_region
      %s126 = ssub.s32 3200, 3200
      %127 = vsyncadd [#allocation18], %s126
      %s128 = sshll.u32 [#allocation17], 4
      %s129 = int_to_ptr.vmem [resolvable:$true] %s128
      %134 = dma.hbm_to_vmem [thread:$0]  %s9, 3200, %s129, [#allocation18], 64, 64, 4
    $region41: #{_mlp_forward_padded.1} parent=1 // pred_fallthru
      _
    // Predicated region
    $region42: #{_mlp_forward_padded.1} parent=1 // pred_check
      _
    $region43: #{_mlp_forward_padded.1} parent=1 // pred_check_branch
      %136 = sbr.rel (0) target = $region45
    $region44: #{_mlp_forward_padded.1} parent=1 // pred_region
      %s138 = ssub.s32 16, 16
      %139 = vsyncadd [#allocation18], %s138
      %s141 = sshll.u32 [#allocation19], 4
      %s142 = int_to_ptr.vmem [resolvable:$true] %s141
      %144 = dma.hbm_to_vmem [thread:$0]  %s10, 16, %s142, [#allocation18]
    $region45: #{_mlp_forward_padded.1} parent=1 // pred_fallthru
      _
    // Predicated region
    $region46: #{_mlp_forward_padded.1} parent=1 // pred_check
      _
    $region47: #{_mlp_forward_padded.1} parent=1 // pred_check_branch
      %146 = sbr.rel (0) target = $region49
    $region48: #{_mlp_forward_padded.1} parent=1 // pred_region
      %147 = dma.done [#allocation3], 256
    $region49: #{_mlp_forward_padded.1} parent=1 // pred_fallthru
      _
    // Predicated region
    $region50: #{_mlp_forward_padded.1} parent=1 // pred_check
      _
    $region51: #{_mlp_forward_padded.1} parent=1 // pred_check_branch
      %149 = sbr.rel (0) target = $region53
    $region52: #{_mlp_forward_padded.1} parent=1 // pred_region
      %150 = dma.done [#allocation6], 512
    $region53: #{_mlp_forward_padded.1} parent=1 // pred_fallthru
      _
    // Predicated region
    $region54: #{_mlp_forward_padded.1} parent=1 // pred_check
      _
    $region55: #{_mlp_forward_padded.1} parent=1 // pred_check_branch
      %152 = sbr.rel (0) target = $region57
    $region56: #{_mlp_forward_padded.1} parent=1 // pred_region
      %153 = dma.done [#allocation6], 64
    $region57: #{_mlp_forward_padded.1} parent=1 // pred_fallthru
      _
    // Predicated region
    $region58: #{_mlp_forward_padded.1} parent=1 // pred_check
      _
    $region59: #{_mlp_forward_padded.1} parent=1 // pred_check_branch
      %155 = sbr.rel (0) target = $region61
    $region60: #{_mlp_forward_padded.1} parent=1 // pred_region
      %156 = dma.done [#allocation9], 12800
    $region61: #{_mlp_forward_padded.1} parent=1 // pred_fallthru
      _
    // Predicated region
    $region62: #{_mlp_forward_padded.1} parent=1 // pred_check
      _
    $region63: #{_mlp_forward_padded.1} parent=1 // pred_check_branch
      %158 = sbr.rel (0) target = $region65
    $region64: #{_mlp_forward_padded.1} parent=1 // pred_region
      %159 = dma.done [#allocation9], 64
    $region65: #{_mlp_forward_padded.1} parent=1 // pred_fallthru
      _
    // Predicated region
    $region66: #{_mlp_forward_padded.1} parent=1 // pred_check
      _
    $region67: #{_mlp_forward_padded.1} parent=1 // pred_check_branch
      %161 = sbr.rel (0) target = $region69
    $region68: #{_mlp_forward_padded.1} parent=1 // pred_region
      %162 = dma.done [#allocation12], 12800
    $region69: #{_mlp_forward_padded.1} parent=1 // pred_fallthru
      _
    // Predicated region
    $region70: #{_mlp_forward_padded.1} parent=1 // pred_check
      _
    $region71: #{_mlp_forward_padded.1} parent=1 // pred_check_branch
      %164 = sbr.rel (0) target = $region73
    $region72: #{_mlp_forward_padded.1} parent=1 // pred_region
      %165 = dma.done [#allocation12], 64
    $region73: #{_mlp_forward_padded.1} parent=1 // pred_fallthru
      _
    // Predicated region
    $region74: #{_mlp_forward_padded.1} parent=1 // pred_check
      _
    $region75: #{_mlp_forward_padded.1} parent=1 // pred_check_branch
      %167 = sbr.rel (0) target = $region77
    $region76: #{_mlp_forward_padded.1} parent=1 // pred_region
      %168 = dma.done [#allocation15], 12800
    $region77: #{_mlp_forward_padded.1} parent=1 // pred_fallthru
      _
    // Predicated region
    $region78: #{_mlp_forward_padded.1} parent=1 // pred_check
      _
    $region79: #{_mlp_forward_padded.1} parent=1 // pred_check_branch
      %170 = sbr.rel (0) target = $region81
    $region80: #{_mlp_forward_padded.1} parent=1 // pred_region
      %171 = dma.done [#allocation15], 64
    $region81: #{_mlp_forward_padded.1} parent=1 // pred_fallthru
      _
    // Predicated region
    $region82: #{_mlp_forward_padded.1} parent=1 // pred_check
      _
    $region83: #{_mlp_forward_padded.1} parent=1 // pred_check_branch
      %173 = sbr.rel (0) target = $region85
    $region84: #{_mlp_forward_padded.1} parent=1 // pred_region
      %174 = dma.done [#allocation18], 3200
    $region85: #{_mlp_forward_padded.1} parent=1 // pred_fallthru
      _
    // Predicated region
    $region86: #{_mlp_forward_padded.1} parent=1 // pred_check
      _
    $region87: #{_mlp_forward_padded.1} parent=1 // pred_check_branch
      %176 = sbr.rel (0) target = $region89
    $region88: #{_mlp_forward_padded.1} parent=1 // pred_region
      %177 = dma.done [#allocation18], 16
    $region89: #{_mlp_forward_padded.1} parent=1 // pred_fallthru
      _
    %v179 = vld [vmem:[#allocation2] sm:$0xff]
    %v180 = vld [vmem:[#allocation2 + $0x8] sm:$0xff]
    %v181 = vpack.c.bf16 %v180, %v179
    %v182 = vld [vmem:[#allocation5] sm:$0xff]
    %v183 = vld [vmem:[#allocation5 + $0x8] sm:$0xff]
    %v184 = vld [vmem:[#allocation5 + $0x10] sm:$0xff]
    %v185 = vld [vmem:[#allocation5 + $0x18] sm:$0xff]
    %v186 = vld [vmem:[#allocation7] sm:$0xf]
    %v188 = vlaneseq
    %v189 = vshrl.u32 %v188, 7
    %v190 = vsub.s32 0, %v189
    %v191 = vrot.slane %v186, %v190
    %v192 = vlaneseq
    %v193 = vshrl.u32 %v192, 7
    %v194 = vsub.s32 1, %v193
    %v195 = vrot.slane %v186, %v194
    %v196 = vlaneseq
    %v197 = vshrl.u32 %v196, 7
    %v198 = vsub.s32 2, %v197
    %v199 = vrot.slane %v186, %v198
    %v200 = vlaneseq
    %v201 = vshrl.u32 %v200, 7
    %v202 = vsub.s32 3, %v201
    %v203 = vrot.slane %v186, %v202
    %v212 = vunpack.c.l.b16 %v182
    %v213 = vunpack.c.h.b16 %v182
    %v214 = vunpack.c.l.b16 %v183
    %v215 = vunpack.c.h.b16 %v183
    %v216 = vunpack.c.l.b16 %v184
    %v217 = vunpack.c.h.b16 %v184
    %v218 = vunpack.c.l.b16 %v185
    %v219 = vunpack.c.h.b16 %v185
    %v220 = vpack.c.b16 %v216, %v212
    %v221 = vpack.c.b16 %v217, %v213
    %v222 = vpack.c.b16 %v218, %v214
    %v223 = vpack.c.b16 %v219, %v215
    %vm224 = vcmask 121856
    %v226 = vsel %vm224, %v181, 0
    %vm228 = vcmask 1046528
    %vm229 = vcmask 1047552
    %v230 = vsel %vm228, 4294967295, 65535
    %v231 = vsel %vm229, %v230, 0
    %v233 = vand.u32 %v220, %v231
    %v236 = vand.u32 %v221, %v231
    %v239 = vand.u32 %v222, %v231
    %v242 = vand.u32 %v223, %v231
    %244 = vmatprep.subr.bf16.mxu0 %v236
    %245 = vmatpush1.bf16.msra.mxu0 %v233
    %246 = vmatprep.subr.bf16.mxu0 0
    %247 = vmatpush1.bf16.msra.mxu0 0
    %248 = vmatprep.subr.bf16.mxu0 0
    %249 = vmatpush1.bf16.msra.mxu0 0
    %250 = vmatprep.subr.bf16.mxu0 0
    %251 = vmatpush1.bf16.msra.mxu0 0
    %252 = vmatprep.subr.bf16.mxu0 0
    %253 = vmatpush1.bf16.msra.mxu0 0
    %254 = vmatprep.subr.bf16.mxu0 0
    %255 = vmatpush1.bf16.msra.mxu0 0
    %256 = vmatprep.subr.bf16.mxu0 0
    %257 = vmatpush1.bf16.msra.mxu0 0
    %258 = vmatprep.subr.bf16.mxu0 0
    %259 = vmatpush1.bf16.msra.mxu0 0
    %260 = vmatprep.subr.bf16.mxu0 0
    %261 = vmatpush1.bf16.msra.mxu0 0
    %262 = vmatprep.subr.bf16.mxu0 0
    %263 = vmatpush1.bf16.msra.mxu0 0
    %264 = vmatprep.subr.bf16.mxu0 0
    %265 = vmatpush1.bf16.msra.mxu0 0
    %266 = vmatprep.subr.bf16.mxu0 0
    %267 = vmatpush1.bf16.msra.mxu0 0
    %268 = vmatprep.subr.bf16.mxu0 0
    %269 = vmatpush1.bf16.msra.mxu0 0
    %270 = vmatprep.subr.bf16.mxu0 0
    %271 = vmatpush1.bf16.msra.mxu0 0
    %272 = vmatprep.subr.bf16.mxu0 0
    %273 = vmatpush1.bf16.msra.mxu0 0
    %274 = vmatprep.subr.bf16.mxu0 0
    %275 = vmatpush1.bf16.msra.mxu0 0
    %276 = vmatprep.mubr.bf16.mxu0 0
    %277 = vmatmul.mubr.bf16.gmra.mrb[0].mxu0 %v226
    %v278 = vpop.f32.mrb[0].mxu0
    %v279 = vadd.f32 %v191, %v278
    %v280 = vpop.f32.mrb[0].mxu0
    %v281 = vadd.f32 %v195, %v280
    %v282 = vpop.f32.mrb[0].mxu0
    %v283 = vadd.f32 %v191, %v282
    %v284 = vpop.f32.mrb[0].mxu0
    %v285 = vadd.f32 %v195, %v284
    %286 = vdwg.mxu0
    %287 = vmatprep.subr.bf16.mxu0 %v242
    %288 = vmatpush1.bf16.msra.mxu0 %v239
    %289 = vmatprep.subr.bf16.mxu0 0
    %290 = vmatpush1.bf16.msra.mxu0 0
    %291 = vmatprep.subr.bf16.mxu0 0
    %292 = vmatpush1.bf16.msra.mxu0 0
    %293 = vmatprep.subr.bf16.mxu0 0
    %294 = vmatpush1.bf16.msra.mxu0 0
    %295 = vmatprep.subr.bf16.mxu0 0
    %296 = vmatpush1.bf16.msra.mxu0 0
    %297 = vmatprep.subr.bf16.mxu0 0
    %298 = vmatpush1.bf16.msra.mxu0 0
    %299 = vmatprep.subr.bf16.mxu0 0
    %300 = vmatpush1.bf16.msra.mxu0 0
    %301 = vmatprep.subr.bf16.mxu0 0
    %302 = vmatpush1.bf16.msra.mxu0 0
    %303 = vmatprep.subr.bf16.mxu0 0
    %304 = vmatpush1.bf16.msra.mxu0 0
    %305 = vmatprep.subr.bf16.mxu0 0
    %306 = vmatpush1.bf16.msra.mxu0 0
    %307 = vmatprep.subr.bf16.mxu0 0
    %308 = vmatpush1.bf16.msra.mxu0 0
    %309 = vmatprep.subr.bf16.mxu0 0
    %310 = vmatpush1.bf16.msra.mxu0 0
    %311 = vmatprep.subr.bf16.mxu0 0
    %312 = vmatpush1.bf16.msra.mxu0 0
    %313 = vmatprep.subr.bf16.mxu0 0
    %314 = vmatpush1.bf16.msra.mxu0 0
    %315 = vmatprep.subr.bf16.mxu0 0
    %316 = vmatpush1.bf16.msra.mxu0 0
    %317 = vmatprep.subr.bf16.mxu0 0
    %318 = vmatpush1.bf16.msra.mxu0 0
    %319 = vmatprep.mubr.bf16.mxu0 0
    %320 = vmatmul.mubr.bf16.gmra.mrb[0].mxu0 %v226
    %v321 = vpop.f32.mrb[0].mxu0
    %v322 = vadd.f32 %v199, %v321
    %v323 = vpop.f32.mrb[0].mxu0
    %v324 = vadd.f32 %v203, %v323
    %v325 = vpop.f32.mrb[0].mxu0
    %v326 = vadd.f32 %v199, %v325
    %v327 = vpop.f32.mrb[0].mxu0
    %v328 = vadd.f32 %v203, %v327
    %329 = vdwg.mxu0
    %v330 = vmax.f32 %v279, 0.0
    %v331 = vmax.f32 %v281, 0.0
    %v332 = vmax.f32 %v322, 0.0
    %v333 = vmax.f32 %v324, 0.0
    %v334 = vmax.f32 %v283, 0.0
    %v335 = vmax.f32 %v285, 0.0
    %v336 = vmax.f32 %v326, 0.0
    %v337 = vmax.f32 %v328, 0.0
    %v338 = vpack.c.bf16 %v334, %v330
    %v339 = vpack.c.bf16 %v335, %v331
    %v340 = vpack.c.bf16 %v336, %v332
    %v341 = vpack.c.bf16 %v337, %v333
    %v342 = vld [vmem:[#allocation8] sm:$0xff]
    %v343 = vld [vmem:[#allocation8 + $0x8] sm:$0xff]
    %v344 = vld [vmem:[#allocation8 + $0x10] sm:$0xff]
    %v345 = vld [vmem:[#allocation8 + $0x18] sm:$0xff]
    %v346 = vld [vmem:[#allocation8 + $0x20] sm:$0xff]
    %v347 = vld [vmem:[#allocation8 + $0x28] sm:$0xff]
    %v348 = vld [vmem:[#allocation8 + $0x30] sm:$0xff]
    %v349 = vld [vmem:[#allocation8 + $0x38] sm:$0xff]
    %v350 = vld [vmem:[#allocation8 + $0x40] sm:$0xff]
    %v351 = vld [vmem:[#allocation8 + $0x48] sm:$0xff]
    %v352 = vld [vmem:[#allocation8 + $0x50] sm:$0xff]
    %v353 = vld [vmem:[#allocation8 + $0x58] sm:$0xff]
    %v354 = vld [vmem:[#allocation8 + $0x60] sm:$0xff]
    %v355 = vld [vmem:[#allocation8 + $0x68] sm:$0xff]
    %v356 = vld [vmem:[#allocation8 + $0x70] sm:$0xff]
    %v357 = vld [vmem:[#allocation8 + $0x78] sm:$0xff]
    %v358 = vld [vmem:[#allocation8 + $0x80] sm:$0xff]
    %v359 = vld [vmem:[#allocation8 + $0x88] sm:$0xff]
    %v360 = vld [vmem:[#allocation8 + $0x90] sm:$0xff]
    %v361 = vld [vmem:[#allocation8 + $0x98] sm:$0xff]
    %v362 = vld [vmem:[#allocation8 + $0xa0] sm:$0xff]
    %v363 = vld [vmem:[#allocation8 + $0xa8] sm:$0xff]
    %v364 = vld [vmem:[#allocation8 + $0xb0] sm:$0xff]
    %v365 = vld [vmem:[#allocation8 + $0xb8] sm:$0xff]
    %v366 = vld [vmem:[#allocation8 + $0xc0] sm:$0xff]
    %v367 = vld [vmem:[#allocation8 + $0xc8] sm:$0xff]
    %v368 = vld [vmem:[#allocation8 + $0xd0] sm:$0xff]
    %v369 = vld [vmem:[#allocation8 + $0xd8] sm:$0xff]
    %v370 = vld [vmem:[#allocation8 + $0xe0] sm:$0xff]
    %v371 = vld [vmem:[#allocation8 + $0xe8] sm:$0xff]
    %v372 = vld [vmem:[#allocation8 + $0xf0] sm:$0xff]
    %v373 = vld [vmem:[#allocation8 + $0xf8] sm:$0xff]
    %v374 = vld [vmem:[#allocation8 + $0x100] sm:$0xff]
    %v375 = vld [vmem:[#allocation8 + $0x108] sm:$0xff]
    %v376 = vld [vmem:[#allocation8 + $0x110] sm:$0xff]
    %v377 = vld [vmem:[#allocation8 + $0x118] sm:$0xff]
    %v378 = vld [vmem:[#allocation8 + $0x120] sm:$0xff]
    %v379 = vld [vmem:[#allocation8 + $0x128] sm:$0xff]
    %v380 = vld [vmem:[#allocation8 + $0x130] sm:$0xff]
    %v381 = vld [vmem:[#allocation8 + $0x138] sm:$0xff]
    %v382 = vld [vmem:[#allocation8 + $0x140] sm:$0xff]
    %v383 = vld [vmem:[#allocation8 + $0x148] sm:$0xff]
    %v384 = vld [vmem:[#allocation8 + $0x150] sm:$0xff]
    %v385 = vld [vmem:[#allocation8 + $0x158] sm:$0xff]
    %v386 = vld [vmem:[#allocation8 + $0x160] sm:$0xff]
    %v387 = vld [vmem:[#allocation8 + $0x168] sm:$0xff]
    %v388 = vld [vmem:[#allocation8 + $0x170] sm:$0xff]
    %v389 = vld [vmem:[#allocation8 + $0x178] sm:$0xff]
    %v390 = vld [vmem:[#allocation8 + $0x180] sm:$0xff]
    %v391 = vld [vmem:[#allocation8 + $0x188] sm:$0xff]
    %v392 = vld [vmem:[#allocation8 + $0x190] sm:$0xff]
    %v393 = vld [vmem:[#allocation8 + $0x198] sm:$0xff]
    %v394 = vld [vmem:[#allocation8 + $0x1a0] sm:$0xff]
    %v395 = vld [vmem:[#allocation8 + $0x1a8] sm:$0xff]
    %v396 = vld [vmem:[#allocation8 + $0x1b0] sm:$0xff]
    %v397 = vld [vmem:[#allocation8 + $0x1b8] sm:$0xff]
    %v398 = vld [vmem:[#allocation8 + $0x1c0] sm:$0xff]
    %v399 = vld [vmem:[#allocation8 + $0x1c8] sm:$0xff]
    %v400 = vld [vmem:[#allocation8 + $0x1d0] sm:$0xff]
    %v401 = vld [vmem:[#allocation8 + $0x1d8] sm:$0xff]
    %v402 = vld [vmem:[#allocation8 + $0x1e0] sm:$0xff]
    %v403 = vld [vmem:[#allocation8 + $0x1e8] sm:$0xff]
    %v404 = vld [vmem:[#allocation8 + $0x1f0] sm:$0xff]
    %v405 = vld [vmem:[#allocation8 + $0x1f8] sm:$0xff]
    %v406 = vld [vmem:[#allocation8 + $0x200] sm:$0xff]
    %v407 = vld [vmem:[#allocation8 + $0x208] sm:$0xff]
    %v408 = vld [vmem:[#allocation8 + $0x210] sm:$0xff]
    %v409 = vld [vmem:[#allocation8 + $0x218] sm:$0xff]
    %v410 = vld [vmem:[#allocation8 + $0x220] sm:$0xff]
    %v411 = vld [vmem:[#allocation8 + $0x228] sm:$0xff]
    %v412 = vld [vmem:[#allocation8 + $0x230] sm:$0xff]
    %v413 = vld [vmem:[#allocation8 + $0x238] sm:$0xff]
    %v414 = vld [vmem:[#allocation8 + $0x240] sm:$0xff]
    %v415 = vld [vmem:[#allocation8 + $0x248] sm:$0xff]
    %v416 = vld [vmem:[#allocation8 + $0x250] sm:$0xff]
    %v417 = vld [vmem:[#allocation8 + $0x258] sm:$0xff]
    %v418 = vld [vmem:[#allocation8 + $0x260] sm:$0xff]
    %v419 = vld [vmem:[#allocation8 + $0x268] sm:$0xff]
    %v420 = vld [vmem:[#allocation8 + $0x270] sm:$0xff]
    %v421 = vld [vmem:[#allocation8 + $0x278] sm:$0xff]
    %v422 = vld [vmem:[#allocation8 + $0x280] sm:$0xff]
    %v423 = vld [vmem:[#allocation8 + $0x288] sm:$0xff]
    %v424 = vld [vmem:[#allocation8 + $0x290] sm:$0xff]
    %v425 = vld [vmem:[#allocation8 + $0x298] sm:$0xff]
    %v426 = vld [vmem:[#allocation8 + $0x2a0] sm:$0xff]
    %v427 = vld [vmem:[#allocation8 + $0x2a8] sm:$0xff]
    %v428 = vld [vmem:[#allocation8 + $0x2b0] sm:$0xff]
    %v429 = vld [vmem:[#allocation8 + $0x2b8] sm:$0xff]
    %v430 = vld [vmem:[#allocation8 + $0x2c0] sm:$0xff]
    %v431 = vld [vmem:[#allocation8 + $0x2c8] sm:$0xff]
    %v432 = vld [vmem:[#allocation8 + $0x2d0] sm:$0xff]
    %v433 = vld [vmem:[#allocation8 + $0x2d8] sm:$0xff]
    %v434 = vld [vmem:[#allocation8 + $0x2e0] sm:$0xff]
    %v435 = vld [vmem:[#allocation8 + $0x2e8] sm:$0xff]
    %v436 = vld [vmem:[#allocation8 + $0x2f0] sm:$0xff]
    %v437 = vld [vmem:[#allocation8 + $0x2f8] sm:$0xff]
    %v438 = vld [vmem:[#allocation8 + $0x300] sm:$0xff]
    %v439 = vld [vmem:[#allocation8 + $0x308] sm:$0xff]
    %v440 = vld [vmem:[#allocation8 + $0x310] sm:$0xff]
    %v441 = vld [vmem:[#allocation8 + $0x318] sm:$0xff]
    %v442 = vld [vmem:[#allocation10] sm:$0xf]
    %v444 = vlaneseq
    %v445 = vshrl.u32 %v444, 7
    %v446 = vsub.s32 0, %v445
    %v447 = vrot.slane %v442, %v446
    %v448 = vlaneseq
    %v449 = vshrl.u32 %v448, 7
    %v450 = vsub.s32 1, %v449
    %v451 = vrot.slane %v442, %v450
    %v452 = vlaneseq
    %v453 = vshrl.u32 %v452, 7
    %v454 = vsub.s32 2, %v453
    %v455 = vrot.slane %v442, %v454
    %v456 = vlaneseq
    %v457 = vshrl.u32 %v456, 7
    %v458 = vsub.s32 3, %v457
    %v459 = vrot.slane %v442, %v458
    %v564 = vunpack.c.l.b16 %v342
    %v565 = vunpack.c.h.b16 %v342
    %v566 = vunpack.c.l.b16 %v343
    %v567 = vunpack.c.h.b16 %v343
    %v568 = vunpack.c.l.b16 %v344
    %v569 = vunpack.c.h.b16 %v344
    %v570 = vunpack.c.l.b16 %v345
    %v571 = vunpack.c.h.b16 %v345
    %v572 = vunpack.c.l.b16 %v346
    %v573 = vunpack.c.h.b16 %v346
    %v574 = vunpack.c.l.b16 %v347
    %v575 = vunpack.c.h.b16 %v347
    %v576 = vunpack.c.l.b16 %v348
    %v577 = vunpack.c.h.b16 %v348
    %v578 = vunpack.c.l.b16 %v349
    %v579 = vunpack.c.h.b16 %v349
    %v580 = vunpack.c.l.b16 %v350
    %v581 = vunpack.c.h.b16 %v350
    %v582 = vunpack.c.l.b16 %v351
    %v583 = vunpack.c.h.b16 %v351
    %v584 = vunpack.c.l.b16 %v352
    %v585 = vunpack.c.h.b16 %v352
    %v586 = vunpack.c.l.b16 %v353
    %v587 = vunpack.c.h.b16 %v353
    %v588 = vunpack.c.l.b16 %v354
    %v589 = vunpack.c.h.b16 %v354
    %v590 = vunpack.c.l.b16 %v355
    %v591 = vunpack.c.h.b16 %v355
    %v592 = vunpack.c.l.b16 %v356
    %v593 = vunpack.c.h.b16 %v356
    %v594 = vunpack.c.l.b16 %v357
    %v595 = vunpack.c.h.b16 %v357
    %v596 = vunpack.c.l.b16 %v358
    %v597 = vunpack.c.h.b16 %v358
    %v598 = vunpack.c.l.b16 %v359
    %v599 = vunpack.c.h.b16 %v359
    %v600 = vunpack.c.l.b16 %v360
    %v601 = vunpack.c.h.b16 %v360
    %v602 = vunpack.c.l.b16 %v361
    %v603 = vunpack.c.h.b16 %v361
    %v604 = vunpack.c.l.b16 %v362
    %v605 = vunpack.c.h.b16 %v362
    %v606 = vunpack.c.l.b16 %v363
    %v607 = vunpack.c.h.b16 %v363
    %v608 = vunpack.c.l.b16 %v364
    %v609 = vunpack.c.h.b16 %v364
    %v610 = vunpack.c.l.b16 %v365
    %v611 = vunpack.c.h.b16 %v365
    %v612 = vunpack.c.l.b16 %v366
    %v613 = vunpack.c.h.b16 %v366
    %v614 = vunpack.c.l.b16 %v367
    %v615 = vunpack.c.h.b16 %v367
    %v616 = vunpack.c.l.b16 %v368
    %v617 = vunpack.c.h.b16 %v368
    %v618 = vunpack.c.l.b16 %v369
    %v619 = vunpack.c.h.b16 %v369
    %v620 = vunpack.c.l.b16 %v370
    %v621 = vunpack.c.h.b16 %v370
    %v622 = vunpack.c.l.b16 %v371
    %v623 = vunpack.c.h.b16 %v371
    %v624 = vunpack.c.l.b16 %v372
    %v625 = vunpack.c.h.b16 %v372
    %v626 = vunpack.c.l.b16 %v373
    %v627 = vunpack.c.h.b16 %v373
    %v628 = vunpack.c.l.b16 %v374
    %v629 = vunpack.c.h.b16 %v374
    %v630 = vunpack.c.l.b16 %v375
    %v631 = vunpack.c.h.b16 %v375
    %v632 = vunpack.c.l.b16 %v376
    %v633 = vunpack.c.h.b16 %v376
    %v634 = vunpack.c.l.b16 %v377
    %v635 = vunpack.c.h.b16 %v377
    %v636 = vunpack.c.l.b16 %v378
    %v637 = vunpack.c.h.b16 %v378
    %v638 = vunpack.c.l.b16 %v379
    %v639 = vunpack.c.h.b16 %v379
    %v640 = vunpack.c.l.b16 %v380
    %v641 = vunpack.c.h.b16 %v380
    %v642 = vunpack.c.l.b16 %v381
    %v643 = vunpack.c.h.b16 %v381
    %v644 = vunpack.c.l.b16 %v382
    %v645 = vunpack.c.h.b16 %v382
    %v646 = vunpack.c.l.b16 %v383
    %v647 = vunpack.c.h.b16 %v383
    %v648 = vunpack.c.l.b16 %v384
    %v649 = vunpack.c.h.b16 %v384
    %v650 = vunpack.c.l.b16 %v385
    %v651 = vunpack.c.h.b16 %v385
    %v652 = vunpack.c.l.b16 %v386
    %v653 = vunpack.c.h.b16 %v386
    %v654 = vunpack.c.l.b16 %v387
    %v655 = vunpack.c.h.b16 %v387
    %v656 = vunpack.c.l.b16 %v388
    %v657 = vunpack.c.h.b16 %v388
    %v658 = vunpack.c.l.b16 %v389
    %v659 = vunpack.c.h.b16 %v389
    %v660 = vunpack.c.l.b16 %v390
    %v661 = vunpack.c.h.b16 %v390
    %v662 = vunpack.c.l.b16 %v391
    %v663 = vunpack.c.h.b16 %v391
    %v664 = vunpack.c.l.b16 %v392
    %v665 = vunpack.c.h.b16 %v392
    %v666 = vunpack.c.l.b16 %v393
    %v667 = vunpack.c.h.b16 %v393
    %v668 = vunpack.c.l.b16 %v394
    %v669 = vunpack.c.h.b16 %v394
    %v670 = vunpack.c.l.b16 %v395
    %v671 = vunpack.c.h.b16 %v395
    %v672 = vunpack.c.l.b16 %v396
    %v673 = vunpack.c.h.b16 %v396
    %v674 = vunpack.c.l.b16 %v397
    %v675 = vunpack.c.h.b16 %v397
    %v676 = vunpack.c.l.b16 %v398
    %v677 = vunpack.c.h.b16 %v398
    %v678 = vunpack.c.l.b16 %v399
    %v679 = vunpack.c.h.b16 %v399
    %v680 = vunpack.c.l.b16 %v400
    %v681 = vunpack.c.h.b16 %v400
    %v682 = vunpack.c.l.b16 %v401
    %v683 = vunpack.c.h.b16 %v401
    %v684 = vunpack.c.l.b16 %v402
    %v685 = vunpack.c.h.b16 %v402
    %v686 = vunpack.c.l.b16 %v403
    %v687 = vunpack.c.h.b16 %v403
    %v688 = vunpack.c.l.b16 %v404
    %v689 = vunpack.c.h.b16 %v404
    %v690 = vunpack.c.l.b16 %v405
    %v691 = vunpack.c.h.b16 %v405
    %v692 = vunpack.c.l.b16 %v406
    %v693 = vunpack.c.h.b16 %v406
    %v694 = vunpack.c.l.b16 %v407
    %v695 = vunpack.c.h.b16 %v407
    %v696 = vunpack.c.l.b16 %v408
    %v697 = vunpack.c.h.b16 %v408
    %v698 = vunpack.c.l.b16 %v409
    %v699 = vunpack.c.h.b16 %v409
    %v700 = vunpack.c.l.b16 %v410
    %v701 = vunpack.c.h.b16 %v410
    %v702 = vunpack.c.l.b16 %v411
    %v703 = vunpack.c.h.b16 %v411
    %v704 = vunpack.c.l.b16 %v412
    %v705 = vunpack.c.h.b16 %v412
    %v706 = vunpack.c.l.b16 %v413
    %v707 = vunpack.c.h.b16 %v413
    %v708 = vunpack.c.l.b16 %v414
    %v709 = vunpack.c.h.b16 %v414
    %v710 = vunpack.c.l.b16 %v415
    %v711 = vunpack.c.h.b16 %v415
    %v712 = vunpack.c.l.b16 %v416
    %v713 = vunpack.c.h.b16 %v416
    %v714 = vunpack.c.l.b16 %v417
    %v715 = vunpack.c.h.b16 %v417
    %v716 = vunpack.c.l.b16 %v418
    %v717 = vunpack.c.h.b16 %v418
    %v718 = vunpack.c.l.b16 %v419
    %v719 = vunpack.c.h.b16 %v419
    %v720 = vunpack.c.l.b16 %v420
    %v721 = vunpack.c.h.b16 %v420
    %v722 = vunpack.c.l.b16 %v421
    %v723 = vunpack.c.h.b16 %v421
    %v724 = vunpack.c.l.b16 %v422
    %v725 = vunpack.c.h.b16 %v422
    %v726 = vunpack.c.l.b16 %v423
    %v727 = vunpack.c.h.b16 %v423
    %v728 = vunpack.c.l.b16 %v424
    %v729 = vunpack.c.h.b16 %v424
    %v730 = vunpack.c.l.b16 %v425
    %v731 = vunpack.c.h.b16 %v425
    %v732 = vunpack.c.l.b16 %v426
    %v733 = vunpack.c.h.b16 %v426
    %v734 = vunpack.c.l.b16 %v427
    %v735 = vunpack.c.h.b16 %v427
    %v736 = vunpack.c.l.b16 %v428
    %v737 = vunpack.c.h.b16 %v428
    %v738 = vunpack.c.l.b16 %v429
    %v739 = vunpack.c.h.b16 %v429
    %v740 = vunpack.c.l.b16 %v430
    %v741 = vunpack.c.h.b16 %v430
    %v742 = vunpack.c.l.b16 %v431
    %v743 = vunpack.c.h.b16 %v431
    %v744 = vunpack.c.l.b16 %v432
    %v745 = vunpack.c.h.b16 %v432
    %v746 = vunpack.c.l.b16 %v433
    %v747 = vunpack.c.h.b16 %v433
    %v748 = vunpack.c.l.b16 %v434
    %v749 = vunpack.c.h.b16 %v434
    %v750 = vunpack.c.l.b16 %v435
    %v751 = vunpack.c.h.b16 %v435
    %v752 = vunpack.c.l.b16 %v436
    %v753 = vunpack.c.h.b16 %v436
    %v754 = vunpack.c.l.b16 %v437
    %v755 = vunpack.c.h.b16 %v437
    %v756 = vunpack.c.l.b16 %v438
    %v757 = vunpack.c.h.b16 %v438
    %v758 = vunpack.c.l.b16 %v439
    %v759 = vunpack.c.h.b16 %v439
    %v760 = vunpack.c.l.b16 %v440
    %v761 = vunpack.c.h.b16 %v440
    %v762 = vunpack.c.l.b16 %v441
    %v763 = vunpack.c.h.b16 %v441
    %v764 = vpack.c.b16 %v568, %v564
    %v765 = vpack.c.b16 %v569, %v565
    %v766 = vpack.c.b16 %v570, %v566
    %v767 = vpack.c.b16 %v571, %v567
    %v768 = vpack.c.b16 %v576, %v572
    %v769 = vpack.c.b16 %v577, %v573
    %v770 = vpack.c.b16 %v578, %v574
    %v771 = vpack.c.b16 %v579, %v575
    %v772 = vpack.c.b16 %v584, %v580
    %v773 = vpack.c.b16 %v585, %v581
    %v774 = vpack.c.b16 %v586, %v582
    %v775 = vpack.c.b16 %v587, %v583
    %v776 = vpack.c.b16 %v592, %v588
    %v777 = vpack.c.b16 %v593, %v589
    %v778 = vpack.c.b16 %v594, %v590
    %v779 = vpack.c.b16 %v595, %v591
    %v780 = vpack.c.b16 %v600, %v596
    %v781 = vpack.c.b16 %v601, %v597
    %v782 = vpack.c.b16 %v602, %v598
    %v783 = vpack.c.b16 %v603, %v599
    %v784 = vpack.c.b16 %v608, %v604
    %v785 = vpack.c.b16 %v609, %v605
    %v786 = vpack.c.b16 %v610, %v606
    %v787 = vpack.c.b16 %v611, %v607
    %v788 = vpack.c.b16 %v616, %v612
    %v789 = vpack.c.b16 %v617, %v613
    %v790 = vpack.c.b16 %v618, %v614
    %v791 = vpack.c.b16 %v619, %v615
    %v792 = vpack.c.b16 %v624, %v620
    %v793 = vpack.c.b16 %v625, %v621
    %v794 = vpack.c.b16 %v626, %v622
    %v795 = vpack.c.b16 %v627, %v623
    %v796 = vpack.c.b16 %v632, %v628
    %v797 = vpack.c.b16 %v633, %v629
    %v798 = vpack.c.b16 %v634, %v630
    %v799 = vpack.c.b16 %v635, %v631
    %v800 = vpack.c.b16 %v640, %v636
    %v801 = vpack.c.b16 %v641, %v637
    %v802 = vpack.c.b16 %v642, %v638
    %v803 = vpack.c.b16 %v643, %v639
    %v804 = vpack.c.b16 %v648, %v644
    %v805 = vpack.c.b16 %v649, %v645
    %v806 = vpack.c.b16 %v650, %v646
    %v807 = vpack.c.b16 %v651, %v647
    %v808 = vpack.c.b16 %v656, %v652
    %v809 = vpack.c.b16 %v657, %v653
    %v810 = vpack.c.b16 %v658, %v654
    %v811 = vpack.c.b16 %v659, %v655
    %v812 = vpack.c.b16 %v664, %v660
    %v813 = vpack.c.b16 %v665, %v661
    %v814 = vpack.c.b16 %v666, %v662
    %v815 = vpack.c.b16 %v667, %v663
    %v816 = vpack.c.b16 %v672, %v668
    %v817 = vpack.c.b16 %v673, %v669
    %v818 = vpack.c.b16 %v674, %v670
    %v819 = vpack.c.b16 %v675, %v671
    %v820 = vpack.c.b16 %v680, %v676
    %v821 = vpack.c.b16 %v681, %v677
    %v822 = vpack.c.b16 %v682, %v678
    %v823 = vpack.c.b16 %v683, %v679
    %v824 = vpack.c.b16 %v688, %v684
    %v825 = vpack.c.b16 %v689, %v685
    %v826 = vpack.c.b16 %v690, %v686
    %v827 = vpack.c.b16 %v691, %v687
    %v828 = vpack.c.b16 %v696, %v692
    %v829 = vpack.c.b16 %v697, %v693
    %v830 = vpack.c.b16 %v698, %v694
    %v831 = vpack.c.b16 %v699, %v695
    %v832 = vpack.c.b16 %v704, %v700
    %v833 = vpack.c.b16 %v705, %v701
    %v834 = vpack.c.b16 %v706, %v702
    %v835 = vpack.c.b16 %v707, %v703
    %v836 = vpack.c.b16 %v712, %v708
    %v837 = vpack.c.b16 %v713, %v709
    %v838 = vpack.c.b16 %v714, %v710
    %v839 = vpack.c.b16 %v715, %v711
    %v840 = vpack.c.b16 %v720, %v716
    %v841 = vpack.c.b16 %v721, %v717
    %v842 = vpack.c.b16 %v722, %v718
    %v843 = vpack.c.b16 %v723, %v719
    %v844 = vpack.c.b16 %v728, %v724
    %v845 = vpack.c.b16 %v729, %v725
    %v846 = vpack.c.b16 %v730, %v726
    %v847 = vpack.c.b16 %v731, %v727
    %v848 = vpack.c.b16 %v736, %v732
    %v849 = vpack.c.b16 %v737, %v733
    %v850 = vpack.c.b16 %v738, %v734
    %v851 = vpack.c.b16 %v739, %v735
    %v852 = vpack.c.b16 %v744, %v740
    %v853 = vpack.c.b16 %v745, %v741
    %v854 = vpack.c.b16 %v746, %v742
    %v855 = vpack.c.b16 %v747, %v743
    %v856 = vpack.c.b16 %v752, %v748
    %v857 = vpack.c.b16 %v753, %v749
    %v858 = vpack.c.b16 %v754, %v750
    %v859 = vpack.c.b16 %v755, %v751
    %v860 = vpack.c.b16 %v760, %v756
    %v861 = vpack.c.b16 %v761, %v757
    %v862 = vpack.c.b16 %v762, %v758
    %v863 = vpack.c.b16 %v763, %v759
    %vm964 = vcmask 130048
    %v966 = vsel %vm964, %v341, 0
    %968 = vmatprep.subr.bf16.mxu0 %v765
    %969 = vmatpush1.bf16.msra.mxu0 %v764
    %970 = vmatprep.subr.bf16.mxu0 %v769
    %971 = vmatpush1.bf16.msra.mxu0 %v768
    %972 = vmatprep.subr.bf16.mxu0 %v773
    %973 = vmatpush1.bf16.msra.mxu0 %v772
    %974 = vmatprep.subr.bf16.mxu0 %v777
    %975 = vmatpush1.bf16.msra.mxu0 %v776
    %976 = vmatprep.subr.bf16.mxu0 %v781
    %977 = vmatpush1.bf16.msra.mxu0 %v780
    %978 = vmatprep.subr.bf16.mxu0 %v785
    %979 = vmatpush1.bf16.msra.mxu0 %v784
    %980 = vmatprep.subr.bf16.mxu0 %v789
    %981 = vmatpush1.bf16.msra.mxu0 %v788
    %982 = vmatprep.subr.bf16.mxu0 %v793
    %983 = vmatpush1.bf16.msra.mxu0 %v792
    %984 = vmatprep.subr.bf16.mxu0 %v797
    %985 = vmatpush1.bf16.msra.mxu0 %v796
    %986 = vmatprep.subr.bf16.mxu0 %v801
    %987 = vmatpush1.bf16.msra.mxu0 %v800
    %988 = vmatprep.subr.bf16.mxu0 %v805
    %989 = vmatpush1.bf16.msra.mxu0 %v804
    %990 = vmatprep.subr.bf16.mxu0 %v809
    %991 = vmatpush1.bf16.msra.mxu0 %v808
    %992 = vmatprep.subr.bf16.mxu0 %v813
    %993 = vmatpush1.bf16.msra.mxu0 %v812
    %994 = vmatprep.subr.bf16.mxu0 %v817
    %995 = vmatpush1.bf16.msra.mxu0 %v816
    %996 = vmatprep.subr.bf16.mxu0 %v821
    %997 = vmatpush1.bf16.msra.mxu0 %v820
    %998 = vmatprep.subr.bf16.mxu0 %v825
    %999 = vmatpush1.bf16.msra.mxu0 %v824
    %1000 = vmatprep.mubr.bf16.mxu0 %v339
    %1001 = vmatmul.mubr.bf16.gmra.mrb[0].mxu0 %v338
    %v1002 = vpop.f32.mrb[0].mxu0
    %v1003 = vadd.f32 %v447, %v1002
    %v1004 = vpop.f32.mrb[0].mxu0
    %v1005 = vadd.f32 %v451, %v1004
    %v1006 = vpop.f32.mrb[0].mxu0
    %v1007 = vadd.f32 %v447, %v1006
    %v1008 = vpop.f32.mrb[0].mxu0
    %v1009 = vadd.f32 %v451, %v1008
    %1010 = vdwg.mxu0
    %1011 = vmatprep.subr.bf16.mxu0 %v829
    %1012 = vmatpush1.bf16.msra.mxu0 %v828
    %1013 = vmatprep.subr.bf16.mxu0 %v833
    %1014 = vmatpush1.bf16.msra.mxu0 %v832
    %1015 = vmatprep.subr.bf16.mxu0 %v837
    %1016 = vmatpush1.bf16.msra.mxu0 %v836
    %1017 = vmatprep.subr.bf16.mxu0 %v841
    %1018 = vmatpush1.bf16.msra.mxu0 %v840
    %1019 = vmatprep.subr.bf16.mxu0 %v845
    %1020 = vmatpush1.bf16.msra.mxu0 %v844
    %1021 = vmatprep.subr.bf16.mxu0 %v849
    %1022 = vmatpush1.bf16.msra.mxu0 %v848
    %1023 = vmatprep.subr.bf16.mxu0 %v853
    %1024 = vmatpush1.bf16.msra.mxu0 %v852
    %1025 = vmatprep.subr.bf16.mxu0 %v857
    %1026 = vmatpush1.bf16.msra.mxu0 %v856
    %1027 = vmatprep.subr.bf16.mxu0 %v861
    %1028 = vmatpush1.bf16.msra.mxu0 %v860
    %1029 = vmatprep.subr.bf16.mxu0 0
    %1030 = vmatpush1.bf16.msra.mxu0 0
    %1031 = vmatprep.subr.bf16.mxu0 0
    %1032 = vmatpush1.bf16.msra.mxu0 0
    %1033 = vmatprep.subr.bf16.mxu0 0
    %1034 = vmatpush1.bf16.msra.mxu0 0
    %1035 = vmatprep.subr.bf16.mxu0 0
    %1036 = vmatpush1.bf16.msra.mxu0 0
    %1037 = vmatprep.subr.bf16.mxu0 0
    %1038 = vmatpush1.bf16.msra.mxu0 0
    %1039 = vmatprep.subr.bf16.mxu0 0
    %1040 = vmatpush1.bf16.msra.mxu0 0
    %1041 = vmatprep.subr.bf16.mxu0 0
    %1042 = vmatpush1.bf16.msra.mxu0 0
    %1043 = vmatprep.mubr.bf16.mxu0 %v966
    %1044 = vmatmul.mubr.bf16.gmra.mrb[0].mxu0 %v340
    %v1045 = vpop.f32.mrb[0].mxu0
    %v1046 = vadd.f32 %v1003, %v1045
    %v1047 = vpop.f32.mrb[0].mxu0
    %v1048 = vadd.f32 %v1005, %v1047
    %v1049 = vpop.f32.mrb[0].mxu0
    %v1050 = vadd.f32 %v1007, %v1049
    %v1051 = vpop.f32.mrb[0].mxu0
    %v1052 = vadd.f32 %v1009, %v1051
    %1053 = vdwg.mxu0
    %1054 = vmatprep.subr.bf16.mxu0 %v767
    %1055 = vmatpush1.bf16.msra.mxu0 %v766
    %1056 = vmatprep.subr.bf16.mxu0 %v771
    %1057 = vmatpush1.bf16.msra.mxu0 %v770
    %1058 = vmatprep.subr.bf16.mxu0 %v775
    %1059 = vmatpush1.bf16.msra.mxu0 %v774
    %1060 = vmatprep.subr.bf16.mxu0 %v779
    %1061 = vmatpush1.bf16.msra.mxu0 %v778
    %1062 = vmatprep.subr.bf16.mxu0 %v783
    %1063 = vmatpush1.bf16.msra.mxu0 %v782
    %1064 = vmatprep.subr.bf16.mxu0 %v787
    %1065 = vmatpush1.bf16.msra.mxu0 %v786
    %1066 = vmatprep.subr.bf16.mxu0 %v791
    %1067 = vmatpush1.bf16.msra.mxu0 %v790
    %1068 = vmatprep.subr.bf16.mxu0 %v795
    %1069 = vmatpush1.bf16.msra.mxu0 %v794
    %1070 = vmatprep.subr.bf16.mxu0 %v799
    %1071 = vmatpush1.bf16.msra.mxu0 %v798
    %1072 = vmatprep.subr.bf16.mxu0 %v803
    %1073 = vmatpush1.bf16.msra.mxu0 %v802
    %1074 = vmatprep.subr.bf16.mxu0 %v807
    %1075 = vmatpush1.bf16.msra.mxu0 %v806
    %1076 = vmatprep.subr.bf16.mxu0 %v811
    %1077 = vmatpush1.bf16.msra.mxu0 %v810
    %1078 = vmatprep.subr.bf16.mxu0 %v815
    %1079 = vmatpush1.bf16.msra.mxu0 %v814
    %1080 = vmatprep.subr.bf16.mxu0 %v819
    %1081 = vmatpush1.bf16.msra.mxu0 %v818
    %1082 = vmatprep.subr.bf16.mxu0 %v823
    %1083 = vmatpush1.bf16.msra.mxu0 %v822
    %1084 = vmatprep.subr.bf16.mxu0 %v827
    %1085 = vmatpush1.bf16.msra.mxu0 %v826
    %1086 = vmatprep.mubr.bf16.mxu0 %v339
    %1087 = vmatmul.mubr.bf16.gmra.mrb[0].mxu0 %v338
    %v1088 = vpop.f32.mrb[0].mxu0
    %v1089 = vadd.f32 %v455, %v1088
    %v1090 = vpop.f32.mrb[0].mxu0
    %v1091 = vadd.f32 %v459, %v1090
    %v1092 = vpop.f32.mrb[0].mxu0
    %v1093 = vadd.f32 %v455, %v1092
    %v1094 = vpop.f32.mrb[0].mxu0
    %v1095 = vadd.f32 %v459, %v1094
    %1096 = vdwg.mxu0
    %1097 = vmatprep.subr.bf16.mxu0 %v831
    %1098 = vmatpush1.bf16.msra.mxu0 %v830
    %1099 = vmatprep.subr.bf16.mxu0 %v835
    %1100 = vmatpush1.bf16.msra.mxu0 %v834
    %1101 = vmatprep.subr.bf16.mxu0 %v839
    %1102 = vmatpush1.bf16.msra.mxu0 %v838
    %1103 = vmatprep.subr.bf16.mxu0 %v843
    %1104 = vmatpush1.bf16.msra.mxu0 %v842
    %1105 = vmatprep.subr.bf16.mxu0 %v847
    %1106 = vmatpush1.bf16.msra.mxu0 %v846
    %1107 = vmatprep.subr.bf16.mxu0 %v851
    %1108 = vmatpush1.bf16.msra.mxu0 %v850
    %1109 = vmatprep.subr.bf16.mxu0 %v855
    %1110 = vmatpush1.bf16.msra.mxu0 %v854
    %1111 = vmatprep.subr.bf16.mxu0 %v859
    %1112 = vmatpush1.bf16.msra.mxu0 %v858
    %1113 = vmatprep.subr.bf16.mxu0 %v863
    %1114 = vmatpush1.bf16.msra.mxu0 %v862
    %1115 = vmatprep.subr.bf16.mxu0 0
    %1116 = vmatpush1.bf16.msra.mxu0 0
    %1117 = vmatprep.subr.bf16.mxu0 0
    %1118 = vmatpush1.bf16.msra.mxu0 0
    %1119 = vmatprep.subr.bf16.mxu0 0
    %1120 = vmatpush1.bf16.msra.mxu0 0
    %1121 = vmatprep.subr.bf16.mxu0 0
    %1122 = vmatpush1.bf16.msra.mxu0 0
    %1123 = vmatprep.subr.bf16.mxu0 0
    %1124 = vmatpush1.bf16.msra.mxu0 0
    %1125 = vmatprep.subr.bf16.mxu0 0
    %1126 = vmatpush1.bf16.msra.mxu0 0
    %1127 = vmatprep.subr.bf16.mxu0 0
    %1128 = vmatpush1.bf16.msra.mxu0 0
    %1129 = vmatprep.mubr.bf16.mxu0 %v966
    %1130 = vmatmul.mubr.bf16.gmra.mrb[0].mxu0 %v340
    %v1131 = vpop.f32.mrb[0].mxu0
    %v1132 = vadd.f32 %v1089, %v1131
    %v1133 = vpop.f32.mrb[0].mxu0
    %v1134 = vadd.f32 %v1091, %v1133
    %v1135 = vpop.f32.mrb[0].mxu0
    %v1136 = vadd.f32 %v1093, %v1135
    %v1137 = vpop.f32.mrb[0].mxu0
    %v1138 = vadd.f32 %v1095, %v1137
    %1139 = vdwg.mxu0
    %v1140 = vmax.f32 %v1046, 0.0
    %v1141 = vmax.f32 %v1048, 0.0
    %v1142 = vmax.f32 %v1132, 0.0
    %v1143 = vmax.f32 %v1134, 0.0
    %v1144 = vmax.f32 %v1050, 0.0
    %v1145 = vmax.f32 %v1052, 0.0
    %v1146 = vmax.f32 %v1136, 0.0
    %v1147 = vmax.f32 %v1138, 0.0
    %v1148 = vpack.c.bf16 %v1144, %v1140
    %v1149 = vpack.c.bf16 %v1145, %v1141
    %v1150 = vpack.c.bf16 %v1146, %v1142
    %v1151 = vpack.c.bf16 %v1147, %v1143
    %v1152 = vld [vmem:[#allocation11] sm:$0xff]
    %v1153 = vld [vmem:[#allocation11 + $0x8] sm:$0xff]
    %v1154 = vld [vmem:[#allocation11 + $0x10] sm:$0xff]
    %v1155 = vld [vmem:[#allocation11 + $0x18] sm:$0xff]
    %v1156 = vld [vmem:[#allocation11 + $0x20] sm:$0xff]
    %v1157 = vld [vmem:[#allocation11 + $0x28] sm:$0xff]
    %v1158 = vld [vmem:[#allocation11 + $0x30] sm:$0xff]
    %v1159 = vld [vmem:[#allocation11 + $0x38] sm:$0xff]
    %v1160 = vld [vmem:[#allocation11 + $0x40] sm:$0xff]
    %v1161 = vld [vmem:[#allocation11 + $0x48] sm:$0xff]
    %v1162 = vld [vmem:[#allocation11 + $0x50] sm:$0xff]
    %v1163 = vld [vmem:[#allocation11 + $0x58] sm:$0xff]
    %v1164 = vld [vmem:[#allocation11 + $0x60] sm:$0xff]
    %v1165 = vld [vmem:[#allocation11 + $0x68] sm:$0xff]
    %v1166 = vld [vmem:[#allocation11 + $0x70] sm:$0xff]
    %v1167 = vld [vmem:[#allocation11 + $0x78] sm:$0xff]
    %v1168 = vld [vmem:[#allocation11 + $0x80] sm:$0xff]
    %v1169 = vld [vmem:[#allocation11 + $0x88] sm:$0xff]
    %v1170 = vld [vmem:[#allocation11 + $0x90] sm:$0xff]
    %v1171 = vld [vmem:[#allocation11 + $0x98] sm:$0xff]
    %v1172 = vld [vmem:[#allocation11 + $0xa0] sm:$0xff]
    %v1173 = vld [vmem:[#allocation11 + $0xa8] sm:$0xff]
    %v1174 = vld [vmem:[#allocation11 + $0xb0] sm:$0xff]
    %v1175 = vld [vmem:[#allocation11 + $0xb8] sm:$0xff]
    %v1176 = vld [vmem:[#allocation11 + $0xc0] sm:$0xff]
    %v1177 = vld [vmem:[#allocation11 + $0xc8] sm:$0xff]
    %v1178 = vld [vmem:[#allocation11 + $0xd0] sm:$0xff]
    %v1179 = vld [vmem:[#allocation11 + $0xd8] sm:$0xff]
    %v1180 = vld [vmem:[#allocation11 + $0xe0] sm:$0xff]
    %v1181 = vld [vmem:[#allocation11 + $0xe8] sm:$0xff]
    %v1182 = vld [vmem:[#allocation11 + $0xf0] sm:$0xff]
    %v1183 = vld [vmem:[#allocation11 + $0xf8] sm:$0xff]
    %v1184 = vld [vmem:[#allocation11 + $0x100] sm:$0xff]
    %v1185 = vld [vmem:[#allocation11 + $0x108] sm:$0xff]
    %v1186 = vld [vmem:[#allocation11 + $0x110] sm:$0xff]
    %v1187 = vld [vmem:[#allocation11 + $0x118] sm:$0xff]
    %v1188 = vld [vmem:[#allocation11 + $0x120] sm:$0xff]
    %v1189 = vld [vmem:[#allocation11 + $0x128] sm:$0xff]
    %v1190 = vld [vmem:[#allocation11 + $0x130] sm:$0xff]
    %v1191 = vld [vmem:[#allocation11 + $0x138] sm:$0xff]
    %v1192 = vld [vmem:[#allocation11 + $0x140] sm:$0xff]
    %v1193 = vld [vmem:[#allocation11 + $0x148] sm:$0xff]
    %v1194 = vld [vmem:[#allocation11 + $0x150] sm:$0xff]
    %v1195 = vld [vmem:[#allocation11 + $0x158] sm:$0xff]
    %v1196 = vld [vmem:[#allocation11 + $0x160] sm:$0xff]
    %v1197 = vld [vmem:[#allocation11 + $0x168] sm:$0xff]
    %v1198 = vld [vmem:[#allocation11 + $0x170] sm:$0xff]
    %v1199 = vld [vmem:[#allocation11 + $0x178] sm:$0xff]
    %v1200 = vld [vmem:[#allocation11 + $0x180] sm:$0xff]
    %v1201 = vld [vmem:[#allocation11 + $0x188] sm:$0xff]
    %v1202 = vld [vmem:[#allocation11 + $0x190] sm:$0xff]
    %v1203 = vld [vmem:[#allocation11 + $0x198] sm:$0xff]
    %v1204 = vld [vmem:[#allocation11 + $0x1a0] sm:$0xff]
    %v1205 = vld [vmem:[#allocation11 + $0x1a8] sm:$0xff]
    %v1206 = vld [vmem:[#allocation11 + $0x1b0] sm:$0xff]
    %v1207 = vld [vmem:[#allocation11 + $0x1b8] sm:$0xff]
    %v1208 = vld [vmem:[#allocation11 + $0x1c0] sm:$0xff]
    %v1209 = vld [vmem:[#allocation11 + $0x1c8] sm:$0xff]
    %v1210 = vld [vmem:[#allocation11 + $0x1d0] sm:$0xff]
    %v1211 = vld [vmem:[#allocation11 + $0x1d8] sm:$0xff]
    %v1212 = vld [vmem:[#allocation11 + $0x1e0] sm:$0xff]
    %v1213 = vld [vmem:[#allocation11 + $0x1e8] sm:$0xff]
    %v1214 = vld [vmem:[#allocation11 + $0x1f0] sm:$0xff]
    %v1215 = vld [vmem:[#allocation11 + $0x1f8] sm:$0xff]
    %v1216 = vld [vmem:[#allocation11 + $0x200] sm:$0xff]
    %v1217 = vld [vmem:[#allocation11 + $0x208] sm:$0xff]
    %v1218 = vld [vmem:[#allocation11 + $0x210] sm:$0xff]
    %v1219 = vld [vmem:[#allocation11 + $0x218] sm:$0xff]
    %v1220 = vld [vmem:[#allocation11 + $0x220] sm:$0xff]
    %v1221 = vld [vmem:[#allocation11 + $0x228] sm:$0xff]
    %v1222 = vld [vmem:[#allocation11 + $0x230] sm:$0xff]
    %v1223 = vld [vmem:[#allocation11 + $0x238] sm:$0xff]
    %v1224 = vld [vmem:[#allocation11 + $0x240] sm:$0xff]
    %v1225 = vld [vmem:[#allocation11 + $0x248] sm:$0xff]
    %v1226 = vld [vmem:[#allocation11 + $0x250] sm:$0xff]
    %v1227 = vld [vmem:[#allocation11 + $0x258] sm:$0xff]
    %v1228 = vld [vmem:[#allocation11 + $0x260] sm:$0xff]
    %v1229 = vld [vmem:[#allocation11 + $0x268] sm:$0xff]
    %v1230 = vld [vmem:[#allocation11 + $0x270] sm:$0xff]
    %v1231 = vld [vmem:[#allocation11 + $0x278] sm:$0xff]
    %v1232 = vld [vmem:[#allocation11 + $0x280] sm:$0xff]
    %v1233 = vld [vmem:[#allocation11 + $0x288] sm:$0xff]
    %v1234 = vld [vmem:[#allocation11 + $0x290] sm:$0xff]
    %v1235 = vld [vmem:[#allocation11 + $0x298] sm:$0xff]
    %v1236 = vld [vmem:[#allocation11 + $0x2a0] sm:$0xff]
    %v1237 = vld [vmem:[#allocation11 + $0x2a8] sm:$0xff]
    %v1238 = vld [vmem:[#allocation11 + $0x2b0] sm:$0xff]
    %v1239 = vld [vmem:[#allocation11 + $0x2b8] sm:$0xff]
    %v1240 = vld [vmem:[#allocation11 + $0x2c0] sm:$0xff]
    %v1241 = vld [vmem:[#allocation11 + $0x2c8] sm:$0xff]
    %v1242 = vld [vmem:[#allocation11 + $0x2d0] sm:$0xff]
    %v1243 = vld [vmem:[#allocation11 + $0x2d8] sm:$0xff]
    %v1244 = vld [vmem:[#allocation11 + $0x2e0] sm:$0xff]
    %v1245 = vld [vmem:[#allocation11 + $0x2e8] sm:$0xff]
    %v1246 = vld [vmem:[#allocation11 + $0x2f0] sm:$0xff]
    %v1247 = vld [vmem:[#allocation11 + $0x2f8] sm:$0xff]
    %v1248 = vld [vmem:[#allocation11 + $0x300] sm:$0xff]
    %v1249 = vld [vmem:[#allocation11 + $0x308] sm:$0xff]
    %v1250 = vld [vmem:[#allocation11 + $0x310] sm:$0xff]
    %v1251 = vld [vmem:[#allocation11 + $0x318] sm:$0xff]
    %v1252 = vld [vmem:[#allocation13] sm:$0xf]
    %v1254 = vlaneseq
    %v1255 = vshrl.u32 %v1254, 7
    %v1256 = vsub.s32 0, %v1255
    %v1257 = vrot.slane %v1252, %v1256
    %v1258 = vlaneseq
    %v1259 = vshrl.u32 %v1258, 7
    %v1260 = vsub.s32 1, %v1259
    %v1261 = vrot.slane %v1252, %v1260
    %v1262 = vlaneseq
    %v1263 = vshrl.u32 %v1262, 7
    %v1264 = vsub.s32 2, %v1263
    %v1265 = vrot.slane %v1252, %v1264
    %v1266 = vlaneseq
    %v1267 = vshrl.u32 %v1266, 7
    %v1268 = vsub.s32 3, %v1267
    %v1269 = vrot.slane %v1252, %v1268
    %v1374 = vunpack.c.l.b16 %v1152
    %v1375 = vunpack.c.h.b16 %v1152
    %v1376 = vunpack.c.l.b16 %v1153
    %v1377 = vunpack.c.h.b16 %v1153
    %v1378 = vunpack.c.l.b16 %v1154
    %v1379 = vunpack.c.h.b16 %v1154
    %v1380 = vunpack.c.l.b16 %v1155
    %v1381 = vunpack.c.h.b16 %v1155
    %v1382 = vunpack.c.l.b16 %v1156
    %v1383 = vunpack.c.h.b16 %v1156
    %v1384 = vunpack.c.l.b16 %v1157
    %v1385 = vunpack.c.h.b16 %v1157
    %v1386 = vunpack.c.l.b16 %v1158
    %v1387 = vunpack.c.h.b16 %v1158
    %v1388 = vunpack.c.l.b16 %v1159
    %v1389 = vunpack.c.h.b16 %v1159
    %v1390 = vunpack.c.l.b16 %v1160
    %v1391 = vunpack.c.h.b16 %v1160
    %v1392 = vunpack.c.l.b16 %v1161
    %v1393 = vunpack.c.h.b16 %v1161
    %v1394 = vunpack.c.l.b16 %v1162
    %v1395 = vunpack.c.h.b16 %v1162
    %v1396 = vunpack.c.l.b16 %v1163
    %v1397 = vunpack.c.h.b16 %v1163
    %v1398 = vunpack.c.l.b16 %v1164
    %v1399 = vunpack.c.h.b16 %v1164
    %v1400 = vunpack.c.l.b16 %v1165
    %v1401 = vunpack.c.h.b16 %v1165
    %v1402 = vunpack.c.l.b16 %v1166
    %v1403 = vunpack.c.h.b16 %v1166
    %v1404 = vunpack.c.l.b16 %v1167
    %v1405 = vunpack.c.h.b16 %v1167
    %v1406 = vunpack.c.l.b16 %v1168
    %v1407 = vunpack.c.h.b16 %v1168
    %v1408 = vunpack.c.l.b16 %v1169
    %v1409 = vunpack.c.h.b16 %v1169
    %v1410 = vunpack.c.l.b16 %v1170
    %v1411 = vunpack.c.h.b16 %v1170
    %v1412 = vunpack.c.l.b16 %v1171
    %v1413 = vunpack.c.h.b16 %v1171
    %v1414 = vunpack.c.l.b16 %v1172
    %v1415 = vunpack.c.h.b16 %v1172
    %v1416 = vunpack.c.l.b16 %v1173
    %v1417 = vunpack.c.h.b16 %v1173
    %v1418 = vunpack.c.l.b16 %v1174
    %v1419 = vunpack.c.h.b16 %v1174
    %v1420 = vunpack.c.l.b16 %v1175
    %v1421 = vunpack.c.h.b16 %v1175
    %v1422 = vunpack.c.l.b16 %v1176
    %v1423 = vunpack.c.h.b16 %v1176
    %v1424 = vunpack.c.l.b16 %v1177
    %v1425 = vunpack.c.h.b16 %v1177
    %v1426 = vunpack.c.l.b16 %v1178
    %v1427 = vunpack.c.h.b16 %v1178
    %v1428 = vunpack.c.l.b16 %v1179
    %v1429 = vunpack.c.h.b16 %v1179
    %v1430 = vunpack.c.l.b16 %v1180
    %v1431 = vunpack.c.h.b16 %v1180
    %v1432 = vunpack.c.l.b16 %v1181
    %v1433 = vunpack.c.h.b16 %v1181
    %v1434 = vunpack.c.l.b16 %v1182
    %v1435 = vunpack.c.h.b16 %v1182
    %v1436 = vunpack.c.l.b16 %v1183
    %v1437 = vunpack.c.h.b16 %v1183
    %v1438 = vunpack.c.l.b16 %v1184
    %v1439 = vunpack.c.h.b16 %v1184
    %v1440 = vunpack.c.l.b16 %v1185
    %v1441 = vunpack.c.h.b16 %v1185
    %v1442 = vunpack.c.l.b16 %v1186
    %v1443 = vunpack.c.h.b16 %v1186
    %v1444 = vunpack.c.l.b16 %v1187
    %v1445 = vunpack.c.h.b16 %v1187
    %v1446 = vunpack.c.l.b16 %v1188
    %v1447 = vunpack.c.h.b16 %v1188
    %v1448 = vunpack.c.l.b16 %v1189
    %v1449 = vunpack.c.h.b16 %v1189
    %v1450 = vunpack.c.l.b16 %v1190
    %v1451 = vunpack.c.h.b16 %v1190
    %v1452 = vunpack.c.l.b16 %v1191
    %v1453 = vunpack.c.h.b16 %v1191
    %v1454 = vunpack.c.l.b16 %v1192
    %v1455 = vunpack.c.h.b16 %v1192
    %v1456 = vunpack.c.l.b16 %v1193
    %v1457 = vunpack.c.h.b16 %v1193
    %v1458 = vunpack.c.l.b16 %v1194
    %v1459 = vunpack.c.h.b16 %v1194
    %v1460 = vunpack.c.l.b16 %v1195
    %v1461 = vunpack.c.h.b16 %v1195
    %v1462 = vunpack.c.l.b16 %v1196
    %v1463 = vunpack.c.h.b16 %v1196
    %v1464 = vunpack.c.l.b16 %v1197
    %v1465 = vunpack.c.h.b16 %v1197
    %v1466 = vunpack.c.l.b16 %v1198
    %v1467 = vunpack.c.h.b16 %v1198
    %v1468 = vunpack.c.l.b16 %v1199
    %v1469 = vunpack.c.h.b16 %v1199
    %v1470 = vunpack.c.l.b16 %v1200
    %v1471 = vunpack.c.h.b16 %v1200
    %v1472 = vunpack.c.l.b16 %v1201
    %v1473 = vunpack.c.h.b16 %v1201
    %v1474 = vunpack.c.l.b16 %v1202
    %v1475 = vunpack.c.h.b16 %v1202
    %v1476 = vunpack.c.l.b16 %v1203
    %v1477 = vunpack.c.h.b16 %v1203
    %v1478 = vunpack.c.l.b16 %v1204
    %v1479 = vunpack.c.h.b16 %v1204
    %v1480 = vunpack.c.l.b16 %v1205
    %v1481 = vunpack.c.h.b16 %v1205
    %v1482 = vunpack.c.l.b16 %v1206
    %v1483 = vunpack.c.h.b16 %v1206
    %v1484 = vunpack.c.l.b16 %v1207
    %v1485 = vunpack.c.h.b16 %v1207
    %v1486 = vunpack.c.l.b16 %v1208
    %v1487 = vunpack.c.h.b16 %v1208
    %v1488 = vunpack.c.l.b16 %v1209
    %v1489 = vunpack.c.h.b16 %v1209
    %v1490 = vunpack.c.l.b16 %v1210
    %v1491 = vunpack.c.h.b16 %v1210
    %v1492 = vunpack.c.l.b16 %v1211
    %v1493 = vunpack.c.h.b16 %v1211
    %v1494 = vunpack.c.l.b16 %v1212
    %v1495 = vunpack.c.h.b16 %v1212
    %v1496 = vunpack.c.l.b16 %v1213
    %v1497 = vunpack.c.h.b16 %v1213
    %v1498 = vunpack.c.l.b16 %v1214
    %v1499 = vunpack.c.h.b16 %v1214
    %v1500 = vunpack.c.l.b16 %v1215
    %v1501 = vunpack.c.h.b16 %v1215
    %v1502 = vunpack.c.l.b16 %v1216
    %v1503 = vunpack.c.h.b16 %v1216
    %v1504 = vunpack.c.l.b16 %v1217
    %v1505 = vunpack.c.h.b16 %v1217
    %v1506 = vunpack.c.l.b16 %v1218
    %v1507 = vunpack.c.h.b16 %v1218
    %v1508 = vunpack.c.l.b16 %v1219
    %v1509 = vunpack.c.h.b16 %v1219
    %v1510 = vunpack.c.l.b16 %v1220
    %v1511 = vunpack.c.h.b16 %v1220
    %v1512 = vunpack.c.l.b16 %v1221
    %v1513 = vunpack.c.h.b16 %v1221
    %v1514 = vunpack.c.l.b16 %v1222
    %v1515 = vunpack.c.h.b16 %v1222
    %v1516 = vunpack.c.l.b16 %v1223
    %v1517 = vunpack.c.h.b16 %v1223
    %v1518 = vunpack.c.l.b16 %v1224
    %v1519 = vunpack.c.h.b16 %v1224
    %v1520 = vunpack.c.l.b16 %v1225
    %v1521 = vunpack.c.h.b16 %v1225
    %v1522 = vunpack.c.l.b16 %v1226
    %v1523 = vunpack.c.h.b16 %v1226
    %v1524 = vunpack.c.l.b16 %v1227
    %v1525 = vunpack.c.h.b16 %v1227
    %v1526 = vunpack.c.l.b16 %v1228
    %v1527 = vunpack.c.h.b16 %v1228
    %v1528 = vunpack.c.l.b16 %v1229
    %v1529 = vunpack.c.h.b16 %v1229
    %v1530 = vunpack.c.l.b16 %v1230
    %v1531 = vunpack.c.h.b16 %v1230
    %v1532 = vunpack.c.l.b16 %v1231
    %v1533 = vunpack.c.h.b16 %v1231
    %v1534 = vunpack.c.l.b16 %v1232
    %v1535 = vunpack.c.h.b16 %v1232
    %v1536 = vunpack.c.l.b16 %v1233
    %v1537 = vunpack.c.h.b16 %v1233
    %v1538 = vunpack.c.l.b16 %v1234
    %v1539 = vunpack.c.h.b16 %v1234
    %v1540 = vunpack.c.l.b16 %v1235
    %v1541 = vunpack.c.h.b16 %v1235
    %v1542 = vunpack.c.l.b16 %v1236
    %v1543 = vunpack.c.h.b16 %v1236
    %v1544 = vunpack.c.l.b16 %v1237
    %v1545 = vunpack.c.h.b16 %v1237
    %v1546 = vunpack.c.l.b16 %v1238
    %v1547 = vunpack.c.h.b16 %v1238
    %v1548 = vunpack.c.l.b16 %v1239
    %v1549 = vunpack.c.h.b16 %v1239
    %v1550 = vunpack.c.l.b16 %v1240
    %v1551 = vunpack.c.h.b16 %v1240
    %v1552 = vunpack.c.l.b16 %v1241
    %v1553 = vunpack.c.h.b16 %v1241
    %v1554 = vunpack.c.l.b16 %v1242
    %v1555 = vunpack.c.h.b16 %v1242
    %v1556 = vunpack.c.l.b16 %v1243
    %v1557 = vunpack.c.h.b16 %v1243
    %v1558 = vunpack.c.l.b16 %v1244
    %v1559 = vunpack.c.h.b16 %v1244
    %v1560 = vunpack.c.l.b16 %v1245
    %v1561 = vunpack.c.h.b16 %v1245
    %v1562 = vunpack.c.l.b16 %v1246
    %v1563 = vunpack.c.h.b16 %v1246
    %v1564 = vunpack.c.l.b16 %v1247
    %v1565 = vunpack.c.h.b16 %v1247
    %v1566 = vunpack.c.l.b16 %v1248
    %v1567 = vunpack.c.h.b16 %v1248
    %v1568 = vunpack.c.l.b16 %v1249
    %v1569 = vunpack.c.h.b16 %v1249
    %v1570 = vunpack.c.l.b16 %v1250
    %v1571 = vunpack.c.h.b16 %v1250
    %v1572 = vunpack.c.l.b16 %v1251
    %v1573 = vunpack.c.h.b16 %v1251
    %v1574 = vpack.c.b16 %v1378, %v1374
    %v1575 = vpack.c.b16 %v1379, %v1375
    %v1576 = vpack.c.b16 %v1380, %v1376
    %v1577 = vpack.c.b16 %v1381, %v1377
    %v1578 = vpack.c.b16 %v1386, %v1382
    %v1579 = vpack.c.b16 %v1387, %v1383
    %v1580 = vpack.c.b16 %v1388, %v1384
    %v1581 = vpack.c.b16 %v1389, %v1385
    %v1582 = vpack.c.b16 %v1394, %v1390
    %v1583 = vpack.c.b16 %v1395, %v1391
    %v1584 = vpack.c.b16 %v1396, %v1392
    %v1585 = vpack.c.b16 %v1397, %v1393
    %v1586 = vpack.c.b16 %v1402, %v1398
    %v1587 = vpack.c.b16 %v1403, %v1399
    %v1588 = vpack.c.b16 %v1404, %v1400
    %v1589 = vpack.c.b16 %v1405, %v1401
    %v1590 = vpack.c.b16 %v1410, %v1406
    %v1591 = vpack.c.b16 %v1411, %v1407
    %v1592 = vpack.c.b16 %v1412, %v1408
    %v1593 = vpack.c.b16 %v1413, %v1409
    %v1594 = vpack.c.b16 %v1418, %v1414
    %v1595 = vpack.c.b16 %v1419, %v1415
    %v1596 = vpack.c.b16 %v1420, %v1416
    %v1597 = vpack.c.b16 %v1421, %v1417
    %v1598 = vpack.c.b16 %v1426, %v1422
    %v1599 = vpack.c.b16 %v1427, %v1423
    %v1600 = vpack.c.b16 %v1428, %v1424
    %v1601 = vpack.c.b16 %v1429, %v1425
    %v1602 = vpack.c.b16 %v1434, %v1430
    %v1603 = vpack.c.b16 %v1435, %v1431
    %v1604 = vpack.c.b16 %v1436, %v1432
    %v1605 = vpack.c.b16 %v1437, %v1433
    %v1606 = vpack.c.b16 %v1442, %v1438
    %v1607 = vpack.c.b16 %v1443, %v1439
    %v1608 = vpack.c.b16 %v1444, %v1440
    %v1609 = vpack.c.b16 %v1445, %v1441
    %v1610 = vpack.c.b16 %v1450, %v1446
    %v1611 = vpack.c.b16 %v1451, %v1447
    %v1612 = vpack.c.b16 %v1452, %v1448
    %v1613 = vpack.c.b16 %v1453, %v1449
    %v1614 = vpack.c.b16 %v1458, %v1454
    %v1615 = vpack.c.b16 %v1459, %v1455
    %v1616 = vpack.c.b16 %v1460, %v1456
    %v1617 = vpack.c.b16 %v1461, %v1457
    %v1618 = vpack.c.b16 %v1466, %v1462
    %v1619 = vpack.c.b16 %v1467, %v1463
    %v1620 = vpack.c.b16 %v1468, %v1464
    %v1621 = vpack.c.b16 %v1469, %v1465
    %v1622 = vpack.c.b16 %v1474, %v1470
    %v1623 = vpack.c.b16 %v1475, %v1471
    %v1624 = vpack.c.b16 %v1476, %v1472
    %v1625 = vpack.c.b16 %v1477, %v1473
    %v1626 = vpack.c.b16 %v1482, %v1478
    %v1627 = vpack.c.b16 %v1483, %v1479
    %v1628 = vpack.c.b16 %v1484, %v1480
    %v1629 = vpack.c.b16 %v1485, %v1481
    %v1630 = vpack.c.b16 %v1490, %v1486
    %v1631 = vpack.c.b16 %v1491, %v1487
    %v1632 = vpack.c.b16 %v1492, %v1488
    %v1633 = vpack.c.b16 %v1493, %v1489
    %v1634 = vpack.c.b16 %v1498, %v1494
    %v1635 = vpack.c.b16 %v1499, %v1495
    %v1636 = vpack.c.b16 %v1500, %v1496
    %v1637 = vpack.c.b16 %v1501, %v1497
    %v1638 = vpack.c.b16 %v1506, %v1502
    %v1639 = vpack.c.b16 %v1507, %v1503
    %v1640 = vpack.c.b16 %v1508, %v1504
    %v1641 = vpack.c.b16 %v1509, %v1505
    %v1642 = vpack.c.b16 %v1514, %v1510
    %v1643 = vpack.c.b16 %v1515, %v1511
    %v1644 = vpack.c.b16 %v1516, %v1512
    %v1645 = vpack.c.b16 %v1517, %v1513
    %v1646 = vpack.c.b16 %v1522, %v1518
    %v1647 = vpack.c.b16 %v1523, %v1519
    %v1648 = vpack.c.b16 %v1524, %v1520
    %v1649 = vpack.c.b16 %v1525, %v1521
    %v1650 = vpack.c.b16 %v1530, %v1526
    %v1651 = vpack.c.b16 %v1531, %v1527
    %v1652 = vpack.c.b16 %v1532, %v1528
    %v1653 = vpack.c.b16 %v1533, %v1529
    %v1654 = vpack.c.b16 %v1538, %v1534
    %v1655 = vpack.c.b16 %v1539, %v1535
    %v1656 = vpack.c.b16 %v1540, %v1536
    %v1657 = vpack.c.b16 %v1541, %v1537
    %v1658 = vpack.c.b16 %v1546, %v1542
    %v1659 = vpack.c.b16 %v1547, %v1543
    %v1660 = vpack.c.b16 %v1548, %v1544
    %v1661 = vpack.c.b16 %v1549, %v1545
    %v1662 = vpack.c.b16 %v1554, %v1550
    %v1663 = vpack.c.b16 %v1555, %v1551
    %v1664 = vpack.c.b16 %v1556, %v1552
    %v1665 = vpack.c.b16 %v1557, %v1553
    %v1666 = vpack.c.b16 %v1562, %v1558
    %v1667 = vpack.c.b16 %v1563, %v1559
    %v1668 = vpack.c.b16 %v1564, %v1560
    %v1669 = vpack.c.b16 %v1565, %v1561
    %v1670 = vpack.c.b16 %v1570, %v1566
    %v1671 = vpack.c.b16 %v1571, %v1567
    %v1672 = vpack.c.b16 %v1572, %v1568
    %v1673 = vpack.c.b16 %v1573, %v1569
    %v1775 = vsel %vm964, %v1151, 0
    %1777 = vmatprep.subr.bf16.mxu0 %v1575
    %1778 = vmatpush1.bf16.msra.mxu0 %v1574
    %1779 = vmatprep.subr.bf16.mxu0 %v1579
    %1780 = vmatpush1.bf16.msra.mxu0 %v1578
    %1781 = vmatprep.subr.bf16.mxu0 %v1583
    %1782 = vmatpush1.bf16.msra.mxu0 %v1582
    %1783 = vmatprep.subr.bf16.mxu0 %v1587
    %1784 = vmatpush1.bf16.msra.mxu0 %v1586
    %1785 = vmatprep.subr.bf16.mxu0 %v1591
    %1786 = vmatpush1.bf16.msra.mxu0 %v1590
    %1787 = vmatprep.subr.bf16.mxu0 %v1595
    %1788 = vmatpush1.bf16.msra.mxu0 %v1594
    %1789 = vmatprep.subr.bf16.mxu0 %v1599
    %1790 = vmatpush1.bf16.msra.mxu0 %v1598
    %1791 = vmatprep.subr.bf16.mxu0 %v1603
    %1792 = vmatpush1.bf16.msra.mxu0 %v1602
    %1793 = vmatprep.subr.bf16.mxu0 %v1607
    %1794 = vmatpush1.bf16.msra.mxu0 %v1606
    %1795 = vmatprep.subr.bf16.mxu0 %v1611
    %1796 = vmatpush1.bf16.msra.mxu0 %v1610
    %1797 = vmatprep.subr.bf16.mxu0 %v1615
    %1798 = vmatpush1.bf16.msra.mxu0 %v1614
    %1799 = vmatprep.subr.bf16.mxu0 %v1619
    %1800 = vmatpush1.bf16.msra.mxu0 %v1618
    %1801 = vmatprep.subr.bf16.mxu0 %v1623
    %1802 = vmatpush1.bf16.msra.mxu0 %v1622
    %1803 = vmatprep.subr.bf16.mxu0 %v1627
    %1804 = vmatpush1.bf16.msra.mxu0 %v1626
    %1805 = vmatprep.subr.bf16.mxu0 %v1631
    %1806 = vmatpush1.bf16.msra.mxu0 %v1630
    %1807 = vmatprep.subr.bf16.mxu0 %v1635
    %1808 = vmatpush1.bf16.msra.mxu0 %v1634
    %1809 = vmatprep.mubr.bf16.mxu0 %v1149
    %1810 = vmatmul.mubr.bf16.gmra.mrb[0].mxu0 %v1148
    %v1811 = vpop.f32.mrb[0].mxu0
    %v1812 = vadd.f32 %v1257, %v1811
    %v1813 = vpop.f32.mrb[0].mxu0
    %v1814 = vadd.f32 %v1261, %v1813
    %v1815 = vpop.f32.mrb[0].mxu0
    %v1816 = vadd.f32 %v1257, %v1815
    %v1817 = vpop.f32.mrb[0].mxu0
    %v1818 = vadd.f32 %v1261, %v1817
    %1819 = vdwg.mxu0
    %1820 = vmatprep.subr.bf16.mxu0 %v1639
    %1821 = vmatpush1.bf16.msra.mxu0 %v1638
    %1822 = vmatprep.subr.bf16.mxu0 %v1643
    %1823 = vmatpush1.bf16.msra.mxu0 %v1642
    %1824 = vmatprep.subr.bf16.mxu0 %v1647
    %1825 = vmatpush1.bf16.msra.mxu0 %v1646
    %1826 = vmatprep.subr.bf16.mxu0 %v1651
    %1827 = vmatpush1.bf16.msra.mxu0 %v1650
    %1828 = vmatprep.subr.bf16.mxu0 %v1655
    %1829 = vmatpush1.bf16.msra.mxu0 %v1654
    %1830 = vmatprep.subr.bf16.mxu0 %v1659
    %1831 = vmatpush1.bf16.msra.mxu0 %v1658
    %1832 = vmatprep.subr.bf16.mxu0 %v1663
    %1833 = vmatpush1.bf16.msra.mxu0 %v1662
    %1834 = vmatprep.subr.bf16.mxu0 %v1667
    %1835 = vmatpush1.bf16.msra.mxu0 %v1666
    %1836 = vmatprep.subr.bf16.mxu0 %v1671
    %1837 = vmatpush1.bf16.msra.mxu0 %v1670
    %1838 = vmatprep.subr.bf16.mxu0 0
    %1839 = vmatpush1.bf16.msra.mxu0 0
    %1840 = vmatprep.subr.bf16.mxu0 0
    %1841 = vmatpush1.bf16.msra.mxu0 0
    %1842 = vmatprep.subr.bf16.mxu0 0
    %1843 = vmatpush1.bf16.msra.mxu0 0
    %1844 = vmatprep.subr.bf16.mxu0 0
    %1845 = vmatpush1.bf16.msra.mxu0 0
    %1846 = vmatprep.subr.bf16.mxu0 0
    %1847 = vmatpush1.bf16.msra.mxu0 0
    %1848 = vmatprep.subr.bf16.mxu0 0
    %1849 = vmatpush1.bf16.msra.mxu0 0
    %1850 = vmatprep.subr.bf16.mxu0 0
    %1851 = vmatpush1.bf16.msra.mxu0 0
    %1852 = vmatprep.mubr.bf16.mxu0 %v1775
    %1853 = vmatmul.mubr.bf16.gmra.mrb[0].mxu0 %v1150
    %v1854 = vpop.f32.mrb[0].mxu0
    %v1855 = vadd.f32 %v1812, %v1854
    %v1856 = vpop.f32.mrb[0].mxu0
    %v1857 = vadd.f32 %v1814, %v1856
    %v1858 = vpop.f32.mrb[0].mxu0
    %v1859 = vadd.f32 %v1816, %v1858
    %v1860 = vpop.f32.mrb[0].mxu0
    %v1861 = vadd.f32 %v1818, %v1860
    %1862 = vdwg.mxu0
    %1863 = vmatprep.subr.bf16.mxu0 %v1577
    %1864 = vmatpush1.bf16.msra.mxu0 %v1576
    %1865 = vmatprep.subr.bf16.mxu0 %v1581
    %1866 = vmatpush1.bf16.msra.mxu0 %v1580
    %1867 = vmatprep.subr.bf16.mxu0 %v1585
    %1868 = vmatpush1.bf16.msra.mxu0 %v1584
    %1869 = vmatprep.subr.bf16.mxu0 %v1589
    %1870 = vmatpush1.bf16.msra.mxu0 %v1588
    %1871 = vmatprep.subr.bf16.mxu0 %v1593
    %1872 = vmatpush1.bf16.msra.mxu0 %v1592
    %1873 = vmatprep.subr.bf16.mxu0 %v1597
    %1874 = vmatpush1.bf16.msra.mxu0 %v1596
    %1875 = vmatprep.subr.bf16.mxu0 %v1601
    %1876 = vmatpush1.bf16.msra.mxu0 %v1600
    %1877 = vmatprep.subr.bf16.mxu0 %v1605
    %1878 = vmatpush1.bf16.msra.mxu0 %v1604
    %1879 = vmatprep.subr.bf16.mxu0 %v1609
    %1880 = vmatpush1.bf16.msra.mxu0 %v1608
    %1881 = vmatprep.subr.bf16.mxu0 %v1613
    %1882 = vmatpush1.bf16.msra.mxu0 %v1612
    %1883 = vmatprep.subr.bf16.mxu0 %v1617
    %1884 = vmatpush1.bf16.msra.mxu0 %v1616
    %1885 = vmatprep.subr.bf16.mxu0 %v1621
    %1886 = vmatpush1.bf16.msra.mxu0 %v1620
    %1887 = vmatprep.subr.bf16.mxu0 %v1625
    %1888 = vmatpush1.bf16.msra.mxu0 %v1624
    %1889 = vmatprep.subr.bf16.mxu0 %v1629
    %1890 = vmatpush1.bf16.msra.mxu0 %v1628
    %1891 = vmatprep.subr.bf16.mxu0 %v1633
    %1892 = vmatpush1.bf16.msra.mxu0 %v1632
    %1893 = vmatprep.subr.bf16.mxu0 %v1637
    %1894 = vmatpush1.bf16.msra.mxu0 %v1636
    %1895 = vmatprep.mubr.bf16.mxu0 %v1149
    %1896 = vmatmul.mubr.bf16.gmra.mrb[0].mxu0 %v1148
    %v1897 = vpop.f32.mrb[0].mxu0
    %v1898 = vadd.f32 %v1265, %v1897
    %v1899 = vpop.f32.mrb[0].mxu0
    %v1900 = vadd.f32 %v1269, %v1899
    %v1901 = vpop.f32.mrb[0].mxu0
    %v1902 = vadd.f32 %v1265, %v1901
    %v1903 = vpop.f32.mrb[0].mxu0
    %v1904 = vadd.f32 %v1269, %v1903
    %1905 = vdwg.mxu0
    %1906 = vmatprep.subr.bf16.mxu0 %v1641
    %1907 = vmatpush1.bf16.msra.mxu0 %v1640
    %1908 = vmatprep.subr.bf16.mxu0 %v1645
    %1909 = vmatpush1.bf16.msra.mxu0 %v1644
    %1910 = vmatprep.subr.bf16.mxu0 %v1649
    %1911 = vmatpush1.bf16.msra.mxu0 %v1648
    %1912 = vmatprep.subr.bf16.mxu0 %v1653
    %1913 = vmatpush1.bf16.msra.mxu0 %v1652
    %1914 = vmatprep.subr.bf16.mxu0 %v1657
    %1915 = vmatpush1.bf16.msra.mxu0 %v1656
    %1916 = vmatprep.subr.bf16.mxu0 %v1661
    %1917 = vmatpush1.bf16.msra.mxu0 %v1660
    %1918 = vmatprep.subr.bf16.mxu0 %v1665
    %1919 = vmatpush1.bf16.msra.mxu0 %v1664
    %1920 = vmatprep.subr.bf16.mxu0 %v1669
    %1921 = vmatpush1.bf16.msra.mxu0 %v1668
    %1922 = vmatprep.subr.bf16.mxu0 %v1673
    %1923 = vmatpush1.bf16.msra.mxu0 %v1672
    %1924 = vmatprep.subr.bf16.mxu0 0
    %1925 = vmatpush1.bf16.msra.mxu0 0
    %1926 = vmatprep.subr.bf16.mxu0 0
    %1927 = vmatpush1.bf16.msra.mxu0 0
    %1928 = vmatprep.subr.bf16.mxu0 0
    %1929 = vmatpush1.bf16.msra.mxu0 0
    %1930 = vmatprep.subr.bf16.mxu0 0
    %1931 = vmatpush1.bf16.msra.mxu0 0
    %1932 = vmatprep.subr.bf16.mxu0 0
    %1933 = vmatpush1.bf16.msra.mxu0 0
    %1934 = vmatprep.subr.bf16.mxu0 0
    %1935 = vmatpush1.bf16.msra.mxu0 0
    %1936 = vmatprep.subr.bf16.mxu0 0
    %1937 = vmatpush1.bf16.msra.mxu0 0
    %1938 = vmatprep.mubr.bf16.mxu0 %v1775
    %1939 = vmatmul.mubr.bf16.gmra.mrb[0].mxu0 %v1150
    %v1940 = vpop.f32.mrb[0].mxu0
    %v1941 = vadd.f32 %v1898, %v1940
    %v1942 = vpop.f32.mrb[0].mxu0
    %v1943 = vadd.f32 %v1900, %v1942
    %v1944 = vpop.f32.mrb[0].mxu0
    %v1945 = vadd.f32 %v1902, %v1944
    %v1946 = vpop.f32.mrb[0].mxu0
    %v1947 = vadd.f32 %v1904, %v1946
    %1948 = vdwg.mxu0
    %v1949 = vmax.f32 %v1855, 0.0
    %v1950 = vmax.f32 %v1857, 0.0
    %v1951 = vmax.f32 %v1941, 0.0
    %v1952 = vmax.f32 %v1943, 0.0
    %v1953 = vmax.f32 %v1859, 0.0
    %v1954 = vmax.f32 %v1861, 0.0
    %v1955 = vmax.f32 %v1945, 0.0
    %v1956 = vmax.f32 %v1947, 0.0
    %v1957 = vpack.c.bf16 %v1953, %v1949
    %v1958 = vpack.c.bf16 %v1954, %v1950
    %v1959 = vpack.c.bf16 %v1955, %v1951
    %v1960 = vpack.c.bf16 %v1956, %v1952
    %v1961 = vld [vmem:[#allocation14] sm:$0xff]
    %v1962 = vld [vmem:[#allocation14 + $0x8] sm:$0xff]
    %v1963 = vld [vmem:[#allocation14 + $0x10] sm:$0xff]
    %v1964 = vld [vmem:[#allocation14 + $0x18] sm:$0xff]
    %v1965 = vld [vmem:[#allocation14 + $0x20] sm:$0xff]
    %v1966 = vld [vmem:[#allocation14 + $0x28] sm:$0xff]
    %v1967 = vld [vmem:[#allocation14 + $0x30] sm:$0xff]
    %v1968 = vld [vmem:[#allocation14 + $0x38] sm:$0xff]
    %v1969 = vld [vmem:[#allocation14 + $0x40] sm:$0xff]
    %v1970 = vld [vmem:[#allocation14 + $0x48] sm:$0xff]
    %v1971 = vld [vmem:[#allocation14 + $0x50] sm:$0xff]
    %v1972 = vld [vmem:[#allocation14 + $0x58] sm:$0xff]
    %v1973 = vld [vmem:[#allocation14 + $0x60] sm:$0xff]
    %v1974 = vld [vmem:[#allocation14 + $0x68] sm:$0xff]
    %v1975 = vld [vmem:[#allocation14 + $0x70] sm:$0xff]
    %v1976 = vld [vmem:[#allocation14 + $0x78] sm:$0xff]
    %v1977 = vld [vmem:[#allocation14 + $0x80] sm:$0xff]
    %v1978 = vld [vmem:[#allocation14 + $0x88] sm:$0xff]
    %v1979 = vld [vmem:[#allocation14 + $0x90] sm:$0xff]
    %v1980 = vld [vmem:[#allocation14 + $0x98] sm:$0xff]
    %v1981 = vld [vmem:[#allocation14 + $0xa0] sm:$0xff]
    %v1982 = vld [vmem:[#allocation14 + $0xa8] sm:$0xff]
    %v1983 = vld [vmem:[#allocation14 + $0xb0] sm:$0xff]
    %v1984 = vld [vmem:[#allocation14 + $0xb8] sm:$0xff]
    %v1985 = vld [vmem:[#allocation14 + $0xc0] sm:$0xff]
    %v1986 = vld [vmem:[#allocation14 + $0xc8] sm:$0xff]
    %v1987 = vld [vmem:[#allocation14 + $0xd0] sm:$0xff]
    %v1988 = vld [vmem:[#allocation14 + $0xd8] sm:$0xff]
    %v1989 = vld [vmem:[#allocation14 + $0xe0] sm:$0xff]
    %v1990 = vld [vmem:[#allocation14 + $0xe8] sm:$0xff]
    %v1991 = vld [vmem:[#allocation14 + $0xf0] sm:$0xff]
    %v1992 = vld [vmem:[#allocation14 + $0xf8] sm:$0xff]
    %v1993 = vld [vmem:[#allocation14 + $0x100] sm:$0xff]
    %v1994 = vld [vmem:[#allocation14 + $0x108] sm:$0xff]
    %v1995 = vld [vmem:[#allocation14 + $0x110] sm:$0xff]
    %v1996 = vld [vmem:[#allocation14 + $0x118] sm:$0xff]
    %v1997 = vld [vmem:[#allocation14 + $0x120] sm:$0xff]
    %v1998 = vld [vmem:[#allocation14 + $0x128] sm:$0xff]
    %v1999 = vld [vmem:[#allocation14 + $0x130] sm:$0xff]
    %v2000 = vld [vmem:[#allocation14 + $0x138] sm:$0xff]
    %v2001 = vld [vmem:[#allocation14 + $0x140] sm:$0xff]
    %v2002 = vld [vmem:[#allocation14 + $0x148] sm:$0xff]
    %v2003 = vld [vmem:[#allocation14 + $0x150] sm:$0xff]
    %v2004 = vld [vmem:[#allocation14 + $0x158] sm:$0xff]
    %v2005 = vld [vmem:[#allocation14 + $0x160] sm:$0xff]
    %v2006 = vld [vmem:[#allocation14 + $0x168] sm:$0xff]
    %v2007 = vld [vmem:[#allocation14 + $0x170] sm:$0xff]
    %v2008 = vld [vmem:[#allocation14 + $0x178] sm:$0xff]
    %v2009 = vld [vmem:[#allocation14 + $0x180] sm:$0xff]
    %v2010 = vld [vmem:[#allocation14 + $0x188] sm:$0xff]
    %v2011 = vld [vmem:[#allocation14 + $0x190] sm:$0xff]
    %v2012 = vld [vmem:[#allocation14 + $0x198] sm:$0xff]
    %v2013 = vld [vmem:[#allocation14 + $0x1a0] sm:$0xff]
    %v2014 = vld [vmem:[#allocation14 + $0x1a8] sm:$0xff]
    %v2015 = vld [vmem:[#allocation14 + $0x1b0] sm:$0xff]
    %v2016 = vld [vmem:[#allocation14 + $0x1b8] sm:$0xff]
    %v2017 = vld [vmem:[#allocation14 + $0x1c0] sm:$0xff]
    %v2018 = vld [vmem:[#allocation14 + $0x1c8] sm:$0xff]
    %v2019 = vld [vmem:[#allocation14 + $0x1d0] sm:$0xff]
    %v2020 = vld [vmem:[#allocation14 + $0x1d8] sm:$0xff]
    %v2021 = vld [vmem:[#allocation14 + $0x1e0] sm:$0xff]
    %v2022 = vld [vmem:[#allocation14 + $0x1e8] sm:$0xff]
    %v2023 = vld [vmem:[#allocation14 + $0x1f0] sm:$0xff]
    %v2024 = vld [vmem:[#allocation14 + $0x1f8] sm:$0xff]
    %v2025 = vld [vmem:[#allocation14 + $0x200] sm:$0xff]
    %v2026 = vld [vmem:[#allocation14 + $0x208] sm:$0xff]
    %v2027 = vld [vmem:[#allocation14 + $0x210] sm:$0xff]
    %v2028 = vld [vmem:[#allocation14 + $0x218] sm:$0xff]
    %v2029 = vld [vmem:[#allocation14 + $0x220] sm:$0xff]
    %v2030 = vld [vmem:[#allocation14 + $0x228] sm:$0xff]
    %v2031 = vld [vmem:[#allocation14 + $0x230] sm:$0xff]
    %v2032 = vld [vmem:[#allocation14 + $0x238] sm:$0xff]
    %v2033 = vld [vmem:[#allocation14 + $0x240] sm:$0xff]
    %v2034 = vld [vmem:[#allocation14 + $0x248] sm:$0xff]
    %v2035 = vld [vmem:[#allocation14 + $0x250] sm:$0xff]
    %v2036 = vld [vmem:[#allocation14 + $0x258] sm:$0xff]
    %v2037 = vld [vmem:[#allocation14 + $0x260] sm:$0xff]
    %v2038 = vld [vmem:[#allocation14 + $0x268] sm:$0xff]
    %v2039 = vld [vmem:[#allocation14 + $0x270] sm:$0xff]
    %v2040 = vld [vmem:[#allocation14 + $0x278] sm:$0xff]
    %v2041 = vld [vmem:[#allocation14 + $0x280] sm:$0xff]
    %v2042 = vld [vmem:[#allocation14 + $0x288] sm:$0xff]
    %v2043 = vld [vmem:[#allocation14 + $0x290] sm:$0xff]
    %v2044 = vld [vmem:[#allocation14 + $0x298] sm:$0xff]
    %v2045 = vld [vmem:[#allocation14 + $0x2a0] sm:$0xff]
    %v2046 = vld [vmem:[#allocation14 + $0x2a8] sm:$0xff]
    %v2047 = vld [vmem:[#allocation14 + $0x2b0] sm:$0xff]
    %v2048 = vld [vmem:[#allocation14 + $0x2b8] sm:$0xff]
    %v2049 = vld [vmem:[#allocation14 + $0x2c0] sm:$0xff]
    %v2050 = vld [vmem:[#allocation14 + $0x2c8] sm:$0xff]
    %v2051 = vld [vmem:[#allocation14 + $0x2d0] sm:$0xff]
    %v2052 = vld [vmem:[#allocation14 + $0x2d8] sm:$0xff]
    %v2053 = vld [vmem:[#allocation14 + $0x2e0] sm:$0xff]
    %v2054 = vld [vmem:[#allocation14 + $0x2e8] sm:$0xff]
    %v2055 = vld [vmem:[#allocation14 + $0x2f0] sm:$0xff]
    %v2056 = vld [vmem:[#allocation14 + $0x2f8] sm:$0xff]
    %v2057 = vld [vmem:[#allocation14 + $0x300] sm:$0xff]
    %v2058 = vld [vmem:[#allocation14 + $0x308] sm:$0xff]
    %v2059 = vld [vmem:[#allocation14 + $0x310] sm:$0xff]
    %v2060 = vld [vmem:[#allocation14 + $0x318] sm:$0xff]
    %v2061 = vld [vmem:[#allocation16] sm:$0xf]
    %v2063 = vlaneseq
    %v2064 = vshrl.u32 %v2063, 7
    %v2065 = vsub.s32 0, %v2064
    %v2066 = vrot.slane %v2061, %v2065
    %v2067 = vlaneseq
    %v2068 = vshrl.u32 %v2067, 7
    %v2069 = vsub.s32 1, %v2068
    %v2070 = vrot.slane %v2061, %v2069
    %v2071 = vlaneseq
    %v2072 = vshrl.u32 %v2071, 7
    %v2073 = vsub.s32 2, %v2072
    %v2074 = vrot.slane %v2061, %v2073
    %v2075 = vlaneseq
    %v2076 = vshrl.u32 %v2075, 7
    %v2077 = vsub.s32 3, %v2076
    %v2078 = vrot.slane %v2061, %v2077
    %v2183 = vunpack.c.l.b16 %v1961
    %v2184 = vunpack.c.h.b16 %v1961
    %v2185 = vunpack.c.l.b16 %v1962
    %v2186 = vunpack.c.h.b16 %v1962
    %v2187 = vunpack.c.l.b16 %v1963
    %v2188 = vunpack.c.h.b16 %v1963
    %v2189 = vunpack.c.l.b16 %v1964
    %v2190 = vunpack.c.h.b16 %v1964
    %v2191 = vunpack.c.l.b16 %v1965
    %v2192 = vunpack.c.h.b16 %v1965
    %v2193 = vunpack.c.l.b16 %v1966
    %v2194 = vunpack.c.h.b16 %v1966
    %v2195 = vunpack.c.l.b16 %v1967
    %v2196 = vunpack.c.h.b16 %v1967
    %v2197 = vunpack.c.l.b16 %v1968
    %v2198 = vunpack.c.h.b16 %v1968
    %v2199 = vunpack.c.l.b16 %v1969
    %v2200 = vunpack.c.h.b16 %v1969
    %v2201 = vunpack.c.l.b16 %v1970
    %v2202 = vunpack.c.h.b16 %v1970
    %v2203 = vunpack.c.l.b16 %v1971
    %v2204 = vunpack.c.h.b16 %v1971
    %v2205 = vunpack.c.l.b16 %v1972
    %v2206 = vunpack.c.h.b16 %v1972
    %v2207 = vunpack.c.l.b16 %v1973
    %v2208 = vunpack.c.h.b16 %v1973
    %v2209 = vunpack.c.l.b16 %v1974
    %v2210 = vunpack.c.h.b16 %v1974
    %v2211 = vunpack.c.l.b16 %v1975
    %v2212 = vunpack.c.h.b16 %v1975
    %v2213 = vunpack.c.l.b16 %v1976
    %v2214 = vunpack.c.h.b16 %v1976
    %v2215 = vunpack.c.l.b16 %v1977
    %v2216 = vunpack.c.h.b16 %v1977
    %v2217 = vunpack.c.l.b16 %v1978
    %v2218 = vunpack.c.h.b16 %v1978
    %v2219 = vunpack.c.l.b16 %v1979
    %v2220 = vunpack.c.h.b16 %v1979
    %v2221 = vunpack.c.l.b16 %v1980
    %v2222 = vunpack.c.h.b16 %v1980
    %v2223 = vunpack.c.l.b16 %v1981
    %v2224 = vunpack.c.h.b16 %v1981
    %v2225 = vunpack.c.l.b16 %v1982
    %v2226 = vunpack.c.h.b16 %v1982
    %v2227 = vunpack.c.l.b16 %v1983
    %v2228 = vunpack.c.h.b16 %v1983
    %v2229 = vunpack.c.l.b16 %v1984
    %v2230 = vunpack.c.h.b16 %v1984
    %v2231 = vunpack.c.l.b16 %v1985
    %v2232 = vunpack.c.h.b16 %v1985
    %v2233 = vunpack.c.l.b16 %v1986
    %v2234 = vunpack.c.h.b16 %v1986
    %v2235 = vunpack.c.l.b16 %v1987
    %v2236 = vunpack.c.h.b16 %v1987
    %v2237 = vunpack.c.l.b16 %v1988
    %v2238 = vunpack.c.h.b16 %v1988
    %v2239 = vunpack.c.l.b16 %v1989
    %v2240 = vunpack.c.h.b16 %v1989
    %v2241 = vunpack.c.l.b16 %v1990
    %v2242 = vunpack.c.h.b16 %v1990
    %v2243 = vunpack.c.l.b16 %v1991
    %v2244 = vunpack.c.h.b16 %v1991
    %v2245 = vunpack.c.l.b16 %v1992
    %v2246 = vunpack.c.h.b16 %v1992
    %v2247 = vunpack.c.l.b16 %v1993
    %v2248 = vunpack.c.h.b16 %v1993
    %v2249 = vunpack.c.l.b16 %v1994
    %v2250 = vunpack.c.h.b16 %v1994
    %v2251 = vunpack.c.l.b16 %v1995
    %v2252 = vunpack.c.h.b16 %v1995
    %v2253 = vunpack.c.l.b16 %v1996
    %v2254 = vunpack.c.h.b16 %v1996
    %v2255 = vunpack.c.l.b16 %v1997
    %v2256 = vunpack.c.h.b16 %v1997
    %v2257 = vunpack.c.l.b16 %v1998
    %v2258 = vunpack.c.h.b16 %v1998
    %v2259 = vunpack.c.l.b16 %v1999
    %v2260 = vunpack.c.h.b16 %v1999
    %v2261 = vunpack.c.l.b16 %v2000
    %v2262 = vunpack.c.h.b16 %v2000
    %v2263 = vunpack.c.l.b16 %v2001
    %v2264 = vunpack.c.h.b16 %v2001
    %v2265 = vunpack.c.l.b16 %v2002
    %v2266 = vunpack.c.h.b16 %v2002
    %v2267 = vunpack.c.l.b16 %v2003
    %v2268 = vunpack.c.h.b16 %v2003
    %v2269 = vunpack.c.l.b16 %v2004
    %v2270 = vunpack.c.h.b16 %v2004
    %v2271 = vunpack.c.l.b16 %v2005
    %v2272 = vunpack.c.h.b16 %v2005
    %v2273 = vunpack.c.l.b16 %v2006
    %v2274 = vunpack.c.h.b16 %v2006
    %v2275 = vunpack.c.l.b16 %v2007
    %v2276 = vunpack.c.h.b16 %v2007
    %v2277 = vunpack.c.l.b16 %v2008
    %v2278 = vunpack.c.h.b16 %v2008
    %v2279 = vunpack.c.l.b16 %v2009
    %v2280 = vunpack.c.h.b16 %v2009
    %v2281 = vunpack.c.l.b16 %v2010
    %v2282 = vunpack.c.h.b16 %v2010
    %v2283 = vunpack.c.l.b16 %v2011
    %v2284 = vunpack.c.h.b16 %v2011
    %v2285 = vunpack.c.l.b16 %v2012
    %v2286 = vunpack.c.h.b16 %v2012
    %v2287 = vunpack.c.l.b16 %v2013
    %v2288 = vunpack.c.h.b16 %v2013
    %v2289 = vunpack.c.l.b16 %v2014
    %v2290 = vunpack.c.h.b16 %v2014
    %v2291 = vunpack.c.l.b16 %v2015
    %v2292 = vunpack.c.h.b16 %v2015
    %v2293 = vunpack.c.l.b16 %v2016
    %v2294 = vunpack.c.h.b16 %v2016
    %v2295 = vunpack.c.l.b16 %v2017
    %v2296 = vunpack.c.h.b16 %v2017
    %v2297 = vunpack.c.l.b16 %v2018
    %v2298 = vunpack.c.h.b16 %v2018
    %v2299 = vunpack.c.l.b16 %v2019
    %v2300 = vunpack.c.h.b16 %v2019
    %v2301 = vunpack.c.l.b16 %v2020
    %v2302 = vunpack.c.h.b16 %v2020
    %v2303 = vunpack.c.l.b16 %v2021
    %v2304 = vunpack.c.h.b16 %v2021
    %v2305 = vunpack.c.l.b16 %v2022
    %v2306 = vunpack.c.h.b16 %v2022
    %v2307 = vunpack.c.l.b16 %v2023
    %v2308 = vunpack.c.h.b16 %v2023
    %v2309 = vunpack.c.l.b16 %v2024
    %v2310 = vunpack.c.h.b16 %v2024
    %v2311 = vunpack.c.l.b16 %v2025
    %v2312 = vunpack.c.h.b16 %v2025
    %v2313 = vunpack.c.l.b16 %v2026
    %v2314 = vunpack.c.h.b16 %v2026
    %v2315 = vunpack.c.l.b16 %v2027
    %v2316 = vunpack.c.h.b16 %v2027
    %v2317 = vunpack.c.l.b16 %v2028
    %v2318 = vunpack.c.h.b16 %v2028
    %v2319 = vunpack.c.l.b16 %v2029
    %v2320 = vunpack.c.h.b16 %v2029
    %v2321 = vunpack.c.l.b16 %v2030
    %v2322 = vunpack.c.h.b16 %v2030
    %v2323 = vunpack.c.l.b16 %v2031
    %v2324 = vunpack.c.h.b16 %v2031
    %v2325 = vunpack.c.l.b16 %v2032
    %v2326 = vunpack.c.h.b16 %v2032
    %v2327 = vunpack.c.l.b16 %v2033
    %v2328 = vunpack.c.h.b16 %v2033
    %v2329 = vunpack.c.l.b16 %v2034
    %v2330 = vunpack.c.h.b16 %v2034
    %v2331 = vunpack.c.l.b16 %v2035
    %v2332 = vunpack.c.h.b16 %v2035
    %v2333 = vunpack.c.l.b16 %v2036
    %v2334 = vunpack.c.h.b16 %v2036
    %v2335 = vunpack.c.l.b16 %v2037
    %v2336 = vunpack.c.h.b16 %v2037
    %v2337 = vunpack.c.l.b16 %v2038
    %v2338 = vunpack.c.h.b16 %v2038
    %v2339 = vunpack.c.l.b16 %v2039
    %v2340 = vunpack.c.h.b16 %v2039
    %v2341 = vunpack.c.l.b16 %v2040
    %v2342 = vunpack.c.h.b16 %v2040
    %v2343 = vunpack.c.l.b16 %v2041
    %v2344 = vunpack.c.h.b16 %v2041
    %v2345 = vunpack.c.l.b16 %v2042
    %v2346 = vunpack.c.h.b16 %v2042
    %v2347 = vunpack.c.l.b16 %v2043
    %v2348 = vunpack.c.h.b16 %v2043
    %v2349 = vunpack.c.l.b16 %v2044
    %v2350 = vunpack.c.h.b16 %v2044
    %v2351 = vunpack.c.l.b16 %v2045
    %v2352 = vunpack.c.h.b16 %v2045
    %v2353 = vunpack.c.l.b16 %v2046
    %v2354 = vunpack.c.h.b16 %v2046
    %v2355 = vunpack.c.l.b16 %v2047
    %v2356 = vunpack.c.h.b16 %v2047
    %v2357 = vunpack.c.l.b16 %v2048
    %v2358 = vunpack.c.h.b16 %v2048
    %v2359 = vunpack.c.l.b16 %v2049
    %v2360 = vunpack.c.h.b16 %v2049
    %v2361 = vunpack.c.l.b16 %v2050
    %v2362 = vunpack.c.h.b16 %v2050
    %v2363 = vunpack.c.l.b16 %v2051
    %v2364 = vunpack.c.h.b16 %v2051
    %v2365 = vunpack.c.l.b16 %v2052
    %v2366 = vunpack.c.h.b16 %v2052
    %v2367 = vunpack.c.l.b16 %v2053
    %v2368 = vunpack.c.h.b16 %v2053
    %v2369 = vunpack.c.l.b16 %v2054
    %v2370 = vunpack.c.h.b16 %v2054
    %v2371 = vunpack.c.l.b16 %v2055
    %v2372 = vunpack.c.h.b16 %v2055
    %v2373 = vunpack.c.l.b16 %v2056
    %v2374 = vunpack.c.h.b16 %v2056
    %v2375 = vunpack.c.l.b16 %v2057
    %v2376 = vunpack.c.h.b16 %v2057
    %v2377 = vunpack.c.l.b16 %v2058
    %v2378 = vunpack.c.h.b16 %v2058
    %v2379 = vunpack.c.l.b16 %v2059
    %v2380 = vunpack.c.h.b16 %v2059
    %v2381 = vunpack.c.l.b16 %v2060
    %v2382 = vunpack.c.h.b16 %v2060
    %v2383 = vpack.c.b16 %v2187, %v2183
    %v2384 = vpack.c.b16 %v2188, %v2184
    %v2385 = vpack.c.b16 %v2189, %v2185
    %v2386 = vpack.c.b16 %v2190, %v2186
    %v2387 = vpack.c.b16 %v2195, %v2191
    %v2388 = vpack.c.b16 %v2196, %v2192
    %v2389 = vpack.c.b16 %v2197, %v2193
    %v2390 = vpack.c.b16 %v2198, %v2194
    %v2391 = vpack.c.b16 %v2203, %v2199
    %v2392 = vpack.c.b16 %v2204, %v2200
    %v2393 = vpack.c.b16 %v2205, %v2201
    %v2394 = vpack.c.b16 %v2206, %v2202
    %v2395 = vpack.c.b16 %v2211, %v2207
    %v2396 = vpack.c.b16 %v2212, %v2208
    %v2397 = vpack.c.b16 %v2213, %v2209
    %v2398 = vpack.c.b16 %v2214, %v2210
    %v2399 = vpack.c.b16 %v2219, %v2215
    %v2400 = vpack.c.b16 %v2220, %v2216
    %v2401 = vpack.c.b16 %v2221, %v2217
    %v2402 = vpack.c.b16 %v2222, %v2218
    %v2403 = vpack.c.b16 %v2227, %v2223
    %v2404 = vpack.c.b16 %v2228, %v2224
    %v2405 = vpack.c.b16 %v2229, %v2225
    %v2406 = vpack.c.b16 %v2230, %v2226
    %v2407 = vpack.c.b16 %v2235, %v2231
    %v2408 = vpack.c.b16 %v2236, %v2232
    %v2409 = vpack.c.b16 %v2237, %v2233
    %v2410 = vpack.c.b16 %v2238, %v2234
    %v2411 = vpack.c.b16 %v2243, %v2239
    %v2412 = vpack.c.b16 %v2244, %v2240
    %v2413 = vpack.c.b16 %v2245, %v2241
    %v2414 = vpack.c.b16 %v2246, %v2242
    %v2415 = vpack.c.b16 %v2251, %v2247
    %v2416 = vpack.c.b16 %v2252, %v2248
    %v2417 = vpack.c.b16 %v2253, %v2249
    %v2418 = vpack.c.b16 %v2254, %v2250
    %v2419 = vpack.c.b16 %v2259, %v2255
    %v2420 = vpack.c.b16 %v2260, %v2256
    %v2421 = vpack.c.b16 %v2261, %v2257
    %v2422 = vpack.c.b16 %v2262, %v2258
    %v2423 = vpack.c.b16 %v2267, %v2263
    %v2424 = vpack.c.b16 %v2268, %v2264
    %v2425 = vpack.c.b16 %v2269, %v2265
    %v2426 = vpack.c.b16 %v2270, %v2266
    %v2427 = vpack.c.b16 %v2275, %v2271
    %v2428 = vpack.c.b16 %v2276, %v2272
    %v2429 = vpack.c.b16 %v2277, %v2273
    %v2430 = vpack.c.b16 %v2278, %v2274
    %v2431 = vpack.c.b16 %v2283, %v2279
    %v2432 = vpack.c.b16 %v2284, %v2280
    %v2433 = vpack.c.b16 %v2285, %v2281
    %v2434 = vpack.c.b16 %v2286, %v2282
    %v2435 = vpack.c.b16 %v2291, %v2287
    %v2436 = vpack.c.b16 %v2292, %v2288
    %v2437 = vpack.c.b16 %v2293, %v2289
    %v2438 = vpack.c.b16 %v2294, %v2290
    %v2439 = vpack.c.b16 %v2299, %v2295
    %v2440 = vpack.c.b16 %v2300, %v2296
    %v2441 = vpack.c.b16 %v2301, %v2297
    %v2442 = vpack.c.b16 %v2302, %v2298
    %v2443 = vpack.c.b16 %v2307, %v2303
    %v2444 = vpack.c.b16 %v2308, %v2304
    %v2445 = vpack.c.b16 %v2309, %v2305
    %v2446 = vpack.c.b16 %v2310, %v2306
    %v2447 = vpack.c.b16 %v2315, %v2311
    %v2448 = vpack.c.b16 %v2316, %v2312
    %v2449 = vpack.c.b16 %v2317, %v2313
    %v2450 = vpack.c.b16 %v2318, %v2314
    %v2451 = vpack.c.b16 %v2323, %v2319
    %v2452 = vpack.c.b16 %v2324, %v2320
    %v2453 = vpack.c.b16 %v2325, %v2321
    %v2454 = vpack.c.b16 %v2326, %v2322
    %v2455 = vpack.c.b16 %v2331, %v2327
    %v2456 = vpack.c.b16 %v2332, %v2328
    %v2457 = vpack.c.b16 %v2333, %v2329
    %v2458 = vpack.c.b16 %v2334, %v2330
    %v2459 = vpack.c.b16 %v2339, %v2335
    %v2460 = vpack.c.b16 %v2340, %v2336
    %v2461 = vpack.c.b16 %v2341, %v2337
    %v2462 = vpack.c.b16 %v2342, %v2338
    %v2463 = vpack.c.b16 %v2347, %v2343
    %v2464 = vpack.c.b16 %v2348, %v2344
    %v2465 = vpack.c.b16 %v2349, %v2345
    %v2466 = vpack.c.b16 %v2350, %v2346
    %v2467 = vpack.c.b16 %v2355, %v2351
    %v2468 = vpack.c.b16 %v2356, %v2352
    %v2469 = vpack.c.b16 %v2357, %v2353
    %v2470 = vpack.c.b16 %v2358, %v2354
    %v2471 = vpack.c.b16 %v2363, %v2359
    %v2472 = vpack.c.b16 %v2364, %v2360
    %v2473 = vpack.c.b16 %v2365, %v2361
    %v2474 = vpack.c.b16 %v2366, %v2362
    %v2475 = vpack.c.b16 %v2371, %v2367
    %v2476 = vpack.c.b16 %v2372, %v2368
    %v2477 = vpack.c.b16 %v2373, %v2369
    %v2478 = vpack.c.b16 %v2374, %v2370
    %v2479 = vpack.c.b16 %v2379, %v2375
    %v2480 = vpack.c.b16 %v2380, %v2376
    %v2481 = vpack.c.b16 %v2381, %v2377
    %v2482 = vpack.c.b16 %v2382, %v2378
    %v2584 = vsel %vm964, %v1960, 0
    %2586 = vmatprep.subr.bf16.mxu0 %v2384
    %2587 = vmatpush1.bf16.msra.mxu0 %v2383
    %2588 = vmatprep.subr.bf16.mxu0 %v2388
    %2589 = vmatpush1.bf16.msra.mxu0 %v2387
    %2590 = vmatprep.subr.bf16.mxu0 %v2392
    %2591 = vmatpush1.bf16.msra.mxu0 %v2391
    %2592 = vmatprep.subr.bf16.mxu0 %v2396
    %2593 = vmatpush1.bf16.msra.mxu0 %v2395
    %2594 = vmatprep.subr.bf16.mxu0 %v2400
    %2595 = vmatpush1.bf16.msra.mxu0 %v2399
    %2596 = vmatprep.subr.bf16.mxu0 %v2404
    %2597 = vmatpush1.bf16.msra.mxu0 %v2403
    %2598 = vmatprep.subr.bf16.mxu0 %v2408
    %2599 = vmatpush1.bf16.msra.mxu0 %v2407
    %2600 = vmatprep.subr.bf16.mxu0 %v2412
    %2601 = vmatpush1.bf16.msra.mxu0 %v2411
    %2602 = vmatprep.subr.bf16.mxu0 %v2416
    %2603 = vmatpush1.bf16.msra.mxu0 %v2415
    %2604 = vmatprep.subr.bf16.mxu0 %v2420
    %2605 = vmatpush1.bf16.msra.mxu0 %v2419
    %2606 = vmatprep.subr.bf16.mxu0 %v2424
    %2607 = vmatpush1.bf16.msra.mxu0 %v2423
    %2608 = vmatprep.subr.bf16.mxu0 %v2428
    %2609 = vmatpush1.bf16.msra.mxu0 %v2427
    %2610 = vmatprep.subr.bf16.mxu0 %v2432
    %2611 = vmatpush1.bf16.msra.mxu0 %v2431
    %2612 = vmatprep.subr.bf16.mxu0 %v2436
    %2613 = vmatpush1.bf16.msra.mxu0 %v2435
    %2614 = vmatprep.subr.bf16.mxu0 %v2440
    %2615 = vmatpush1.bf16.msra.mxu0 %v2439
    %2616 = vmatprep.subr.bf16.mxu0 %v2444
    %2617 = vmatpush1.bf16.msra.mxu0 %v2443
    %2618 = vmatprep.mubr.bf16.mxu0 %v1958
    %2619 = vmatmul.mubr.bf16.gmra.mrb[0].mxu0 %v1957
    %v2620 = vpop.f32.mrb[0].mxu0
    %v2621 = vadd.f32 %v2066, %v2620
    %v2622 = vpop.f32.mrb[0].mxu0
    %v2623 = vadd.f32 %v2070, %v2622
    %v2624 = vpop.f32.mrb[0].mxu0
    %v2625 = vadd.f32 %v2066, %v2624
    %v2626 = vpop.f32.mrb[0].mxu0
    %v2627 = vadd.f32 %v2070, %v2626
    %2628 = vdwg.mxu0
    %2629 = vmatprep.subr.bf16.mxu0 %v2448
    %2630 = vmatpush1.bf16.msra.mxu0 %v2447
    %2631 = vmatprep.subr.bf16.mxu0 %v2452
    %2632 = vmatpush1.bf16.msra.mxu0 %v2451
    %2633 = vmatprep.subr.bf16.mxu0 %v2456
    %2634 = vmatpush1.bf16.msra.mxu0 %v2455
    %2635 = vmatprep.subr.bf16.mxu0 %v2460
    %2636 = vmatpush1.bf16.msra.mxu0 %v2459
    %2637 = vmatprep.subr.bf16.mxu0 %v2464
    %2638 = vmatpush1.bf16.msra.mxu0 %v2463
    %2639 = vmatprep.subr.bf16.mxu0 %v2468
    %2640 = vmatpush1.bf16.msra.mxu0 %v2467
    %2641 = vmatprep.subr.bf16.mxu0 %v2472
    %2642 = vmatpush1.bf16.msra.mxu0 %v2471
    %2643 = vmatprep.subr.bf16.mxu0 %v2476
    %2644 = vmatpush1.bf16.msra.mxu0 %v2475
    %2645 = vmatprep.subr.bf16.mxu0 %v2480
    %2646 = vmatpush1.bf16.msra.mxu0 %v2479
    %2647 = vmatprep.subr.bf16.mxu0 0
    %2648 = vmatpush1.bf16.msra.mxu0 0
    %2649 = vmatprep.subr.bf16.mxu0 0
    %2650 = vmatpush1.bf16.msra.mxu0 0
    %2651 = vmatprep.subr.bf16.mxu0 0
    %2652 = vmatpush1.bf16.msra.mxu0 0
    %2653 = vmatprep.subr.bf16.mxu0 0
    %2654 = vmatpush1.bf16.msra.mxu0 0
    %2655 = vmatprep.subr.bf16.mxu0 0
    %2656 = vmatpush1.bf16.msra.mxu0 0
    %2657 = vmatprep.subr.bf16.mxu0 0
    %2658 = vmatpush1.bf16.msra.mxu0 0
    %2659 = vmatprep.subr.bf16.mxu0 0
    %2660 = vmatpush1.bf16.msra.mxu0 0
    %2661 = vmatprep.mubr.bf16.mxu0 %v2584
    %2662 = vmatmul.mubr.bf16.gmra.mrb[0].mxu0 %v1959
    %v2663 = vpop.f32.mrb[0].mxu0
    %v2664 = vadd.f32 %v2621, %v2663
    %v2665 = vpop.f32.mrb[0].mxu0
    %v2666 = vadd.f32 %v2623, %v2665
    %v2667 = vpop.f32.mrb[0].mxu0
    %v2668 = vadd.f32 %v2625, %v2667
    %v2669 = vpop.f32.mrb[0].mxu0
    %v2670 = vadd.f32 %v2627, %v2669
    %2671 = vdwg.mxu0
    %2672 = vmatprep.subr.bf16.mxu0 %v2386
    %2673 = vmatpush1.bf16.msra.mxu0 %v2385
    %2674 = vmatprep.subr.bf16.mxu0 %v2390
    %2675 = vmatpush1.bf16.msra.mxu0 %v2389
    %2676 = vmatprep.subr.bf16.mxu0 %v2394
    %2677 = vmatpush1.bf16.msra.mxu0 %v2393
    %2678 = vmatprep.subr.bf16.mxu0 %v2398
    %2679 = vmatpush1.bf16.msra.mxu0 %v2397
    %2680 = vmatprep.subr.bf16.mxu0 %v2402
    %2681 = vmatpush1.bf16.msra.mxu0 %v2401
    %2682 = vmatprep.subr.bf16.mxu0 %v2406
    %2683 = vmatpush1.bf16.msra.mxu0 %v2405
    %2684 = vmatprep.subr.bf16.mxu0 %v2410
    %2685 = vmatpush1.bf16.msra.mxu0 %v2409
    %2686 = vmatprep.subr.bf16.mxu0 %v2414
    %2687 = vmatpush1.bf16.msra.mxu0 %v2413
    %2688 = vmatprep.subr.bf16.mxu0 %v2418
    %2689 = vmatpush1.bf16.msra.mxu0 %v2417
    %2690 = vmatprep.subr.bf16.mxu0 %v2422
    %2691 = vmatpush1.bf16.msra.mxu0 %v2421
    %2692 = vmatprep.subr.bf16.mxu0 %v2426
    %2693 = vmatpush1.bf16.msra.mxu0 %v2425
    %2694 = vmatprep.subr.bf16.mxu0 %v2430
    %2695 = vmatpush1.bf16.msra.mxu0 %v2429
    %2696 = vmatprep.subr.bf16.mxu0 %v2434
    %2697 = vmatpush1.bf16.msra.mxu0 %v2433
    %2698 = vmatprep.subr.bf16.mxu0 %v2438
    %2699 = vmatpush1.bf16.msra.mxu0 %v2437
    %2700 = vmatprep.subr.bf16.mxu0 %v2442
    %2701 = vmatpush1.bf16.msra.mxu0 %v2441
    %2702 = vmatprep.subr.bf16.mxu0 %v2446
    %2703 = vmatpush1.bf16.msra.mxu0 %v2445
    %2704 = vmatprep.mubr.bf16.mxu0 %v1958
    %2705 = vmatmul.mubr.bf16.gmra.mrb[0].mxu0 %v1957
    %v2706 = vpop.f32.mrb[0].mxu0
    %v2707 = vadd.f32 %v2074, %v2706
    %v2708 = vpop.f32.mrb[0].mxu0
    %v2709 = vadd.f32 %v2078, %v2708
    %v2710 = vpop.f32.mrb[0].mxu0
    %v2711 = vadd.f32 %v2074, %v2710
    %v2712 = vpop.f32.mrb[0].mxu0
    %v2713 = vadd.f32 %v2078, %v2712
    %2714 = vdwg.mxu0
    %2715 = vmatprep.subr.bf16.mxu0 %v2450
    %2716 = vmatpush1.bf16.msra.mxu0 %v2449
    %2717 = vmatprep.subr.bf16.mxu0 %v2454
    %2718 = vmatpush1.bf16.msra.mxu0 %v2453
    %2719 = vmatprep.subr.bf16.mxu0 %v2458
    %2720 = vmatpush1.bf16.msra.mxu0 %v2457
    %2721 = vmatprep.subr.bf16.mxu0 %v2462
    %2722 = vmatpush1.bf16.msra.mxu0 %v2461
    %2723 = vmatprep.subr.bf16.mxu0 %v2466
    %2724 = vmatpush1.bf16.msra.mxu0 %v2465
    %2725 = vmatprep.subr.bf16.mxu0 %v2470
    %2726 = vmatpush1.bf16.msra.mxu0 %v2469
    %2727 = vmatprep.subr.bf16.mxu0 %v2474
    %2728 = vmatpush1.bf16.msra.mxu0 %v2473
    %2729 = vmatprep.subr.bf16.mxu0 %v2478
    %2730 = vmatpush1.bf16.msra.mxu0 %v2477
    %2731 = vmatprep.subr.bf16.mxu0 %v2482
    %2732 = vmatpush1.bf16.msra.mxu0 %v2481
    %2733 = vmatprep.subr.bf16.mxu0 0
    %2734 = vmatpush1.bf16.msra.mxu0 0
    %2735 = vmatprep.subr.bf16.mxu0 0
    %2736 = vmatpush1.bf16.msra.mxu0 0
    %2737 = vmatprep.subr.bf16.mxu0 0
    %2738 = vmatpush1.bf16.msra.mxu0 0
    %2739 = vmatprep.subr.bf16.mxu0 0
    %2740 = vmatpush1.bf16.msra.mxu0 0
    %2741 = vmatprep.subr.bf16.mxu0 0
    %2742 = vmatpush1.bf16.msra.mxu0 0
    %2743 = vmatprep.subr.bf16.mxu0 0
    %2744 = vmatpush1.bf16.msra.mxu0 0
    %2745 = vmatprep.subr.bf16.mxu0 0
    %2746 = vmatpush1.bf16.msra.mxu0 0
    %2747 = vmatprep.mubr.bf16.mxu0 %v2584
    %2748 = vmatmul.mubr.bf16.gmra.mrb[0].mxu0 %v1959
    %v2749 = vpop.f32.mrb[0].mxu0
    %v2750 = vadd.f32 %v2707, %v2749
    %v2751 = vpop.f32.mrb[0].mxu0
    %v2752 = vadd.f32 %v2709, %v2751
    %v2753 = vpop.f32.mrb[0].mxu0
    %v2754 = vadd.f32 %v2711, %v2753
    %v2755 = vpop.f32.mrb[0].mxu0
    %v2756 = vadd.f32 %v2713, %v2755
    %2757 = vdwg.mxu0
    %v2758 = vmax.f32 %v2664, 0.0
    %v2759 = vmax.f32 %v2666, 0.0
    %v2760 = vmax.f32 %v2750, 0.0
    %v2761 = vmax.f32 %v2752, 0.0
    %v2762 = vmax.f32 %v2668, 0.0
    %v2763 = vmax.f32 %v2670, 0.0
    %v2764 = vmax.f32 %v2754, 0.0
    %v2765 = vmax.f32 %v2756, 0.0
    %v2766 = vpack.c.bf16 %v2762, %v2758
    %v2767 = vpack.c.bf16 %v2763, %v2759
    %v2768 = vpack.c.bf16 %v2764, %v2760
    %v2769 = vpack.c.bf16 %v2765, %v2761
    %v2770 = vld [vmem:[#allocation17] sm:$0xf]
    %v2771 = vld [vmem:[#allocation17 + $0x4] sm:$0xf]
    %v2772 = vld [vmem:[#allocation17 + $0x8] sm:$0xf]
    %v2773 = vld [vmem:[#allocation17 + $0xc] sm:$0xf]
    %v2774 = vld [vmem:[#allocation17 + $0x10] sm:$0xf]
    %v2775 = vld [vmem:[#allocation17 + $0x14] sm:$0xf]
    %v2776 = vld [vmem:[#allocation17 + $0x18] sm:$0xf]
    %v2777 = vld [vmem:[#allocation17 + $0x1c] sm:$0xf]
    %v2778 = vld [vmem:[#allocation17 + $0x20] sm:$0xf]
    %v2779 = vld [vmem:[#allocation17 + $0x24] sm:$0xf]
    %v2780 = vld [vmem:[#allocation17 + $0x28] sm:$0xf]
    %v2781 = vld [vmem:[#allocation17 + $0x2c] sm:$0xf]
    %v2782 = vld [vmem:[#allocation17 + $0x30] sm:$0xf]
    %v2783 = vld [vmem:[#allocation17 + $0x34] sm:$0xf]
    %v2784 = vld [vmem:[#allocation17 + $0x38] sm:$0xf]
    %v2785 = vld [vmem:[#allocation17 + $0x3c] sm:$0xf]
    %v2786 = vld [vmem:[#allocation17 + $0x40] sm:$0xf]
    %v2787 = vld [vmem:[#allocation17 + $0x44] sm:$0xf]
    %v2788 = vld [vmem:[#allocation17 + $0x48] sm:$0xf]
    %v2789 = vld [vmem:[#allocation17 + $0x4c] sm:$0xf]
    %v2790 = vld [vmem:[#allocation17 + $0x50] sm:$0xf]
    %v2791 = vld [vmem:[#allocation17 + $0x54] sm:$0xf]
    %v2792 = vld [vmem:[#allocation17 + $0x58] sm:$0xf]
    %v2793 = vld [vmem:[#allocation17 + $0x5c] sm:$0xf]
    %v2794 = vld [vmem:[#allocation17 + $0x60] sm:$0xf]
    %v2795 = vld [vmem:[#allocation17 + $0x64] sm:$0xf]
    %v2796 = vld [vmem:[#allocation17 + $0x68] sm:$0xf]
    %v2797 = vld [vmem:[#allocation17 + $0x6c] sm:$0xf]
    %v2798 = vld [vmem:[#allocation17 + $0x70] sm:$0xf]
    %v2799 = vld [vmem:[#allocation17 + $0x74] sm:$0xf]
    %v2800 = vld [vmem:[#allocation17 + $0x78] sm:$0xf]
    %v2801 = vld [vmem:[#allocation17 + $0x7c] sm:$0xf]
    %v2802 = vld [vmem:[#allocation17 + $0x80] sm:$0xf]
    %v2803 = vld [vmem:[#allocation17 + $0x84] sm:$0xf]
    %v2804 = vld [vmem:[#allocation17 + $0x88] sm:$0xf]
    %v2805 = vld [vmem:[#allocation17 + $0x8c] sm:$0xf]
    %v2806 = vld [vmem:[#allocation17 + $0x90] sm:$0xf]
    %v2807 = vld [vmem:[#allocation17 + $0x94] sm:$0xf]
    %v2808 = vld [vmem:[#allocation17 + $0x98] sm:$0xf]
    %v2809 = vld [vmem:[#allocation17 + $0x9c] sm:$0xf]
    %v2810 = vld [vmem:[#allocation17 + $0xa0] sm:$0xf]
    %v2811 = vld [vmem:[#allocation17 + $0xa4] sm:$0xf]
    %v2812 = vld [vmem:[#allocation17 + $0xa8] sm:$0xf]
    %v2813 = vld [vmem:[#allocation17 + $0xac] sm:$0xf]
    %v2814 = vld [vmem:[#allocation17 + $0xb0] sm:$0xf]
    %v2815 = vld [vmem:[#allocation17 + $0xb4] sm:$0xf]
    %v2816 = vld [vmem:[#allocation17 + $0xb8] sm:$0xf]
    %v2817 = vld [vmem:[#allocation17 + $0xbc] sm:$0xf]
    %v2818 = vld [vmem:[#allocation17 + $0xc0] sm:$0xf]
    %v2819 = vld [vmem:[#allocation17 + $0xc4] sm:$0xf]
    %v2820 = vld [vmem:[#allocation19] sm:$0x1]
    %v2822 = vlaneseq
    %v2823 = vshrl.u32 %v2822, 7
    %v2824 = vsub.s32 0, %v2823
    %v2825 = vrot.slane %v2820, %v2824
    %v2877 = vunpack.c.l.b16 %v2770
    %v2878 = vunpack.c.l.b16 %v2771
    %v2879 = vunpack.c.l.b16 %v2772
    %v2880 = vunpack.c.l.b16 %v2773
    %v2881 = vunpack.c.l.b16 %v2774
    %v2882 = vunpack.c.l.b16 %v2775
    %v2883 = vunpack.c.l.b16 %v2776
    %v2884 = vunpack.c.l.b16 %v2777
    %v2885 = vunpack.c.l.b16 %v2778
    %v2886 = vunpack.c.l.b16 %v2779
    %v2887 = vunpack.c.l.b16 %v2780
    %v2888 = vunpack.c.l.b16 %v2781
    %v2889 = vunpack.c.l.b16 %v2782
    %v2890 = vunpack.c.l.b16 %v2783
    %v2891 = vunpack.c.l.b16 %v2784
    %v2892 = vunpack.c.l.b16 %v2785
    %v2893 = vunpack.c.l.b16 %v2786
    %v2894 = vunpack.c.l.b16 %v2787
    %v2895 = vunpack.c.l.b16 %v2788
    %v2896 = vunpack.c.l.b16 %v2789
    %v2897 = vunpack.c.l.b16 %v2790
    %v2898 = vunpack.c.l.b16 %v2791
    %v2899 = vunpack.c.l.b16 %v2792
    %v2900 = vunpack.c.l.b16 %v2793
    %v2901 = vunpack.c.l.b16 %v2794
    %v2902 = vunpack.c.l.b16 %v2795
    %v2903 = vunpack.c.l.b16 %v2796
    %v2904 = vunpack.c.l.b16 %v2797
    %v2905 = vunpack.c.l.b16 %v2798
    %v2906 = vunpack.c.l.b16 %v2799
    %v2907 = vunpack.c.l.b16 %v2800
    %v2908 = vunpack.c.l.b16 %v2801
    %v2909 = vunpack.c.l.b16 %v2802
    %v2910 = vunpack.c.l.b16 %v2803
    %v2911 = vunpack.c.l.b16 %v2804
    %v2912 = vunpack.c.l.b16 %v2805
    %v2913 = vunpack.c.l.b16 %v2806
    %v2914 = vunpack.c.l.b16 %v2807
    %v2915 = vunpack.c.l.b16 %v2808
    %v2916 = vunpack.c.l.b16 %v2809
    %v2917 = vunpack.c.l.b16 %v2810
    %v2918 = vunpack.c.l.b16 %v2811
    %v2919 = vunpack.c.l.b16 %v2812
    %v2920 = vunpack.c.l.b16 %v2813
    %v2921 = vunpack.c.l.b16 %v2814
    %v2922 = vunpack.c.l.b16 %v2815
    %v2923 = vunpack.c.l.b16 %v2816
    %v2924 = vunpack.c.l.b16 %v2817
    %v2925 = vunpack.c.l.b16 %v2818
    %v2926 = vunpack.c.l.b16 %v2819
    %v2927 = vpack.c.b16 %v2878, %v2877
    %v2928 = vpack.c.b16 %v2880, %v2879
    %v2929 = vpack.c.b16 %v2882, %v2881
    %v2930 = vpack.c.b16 %v2884, %v2883
    %v2931 = vpack.c.b16 %v2886, %v2885
    %v2932 = vpack.c.b16 %v2888, %v2887
    %v2933 = vpack.c.b16 %v2890, %v2889
    %v2934 = vpack.c.b16 %v2892, %v2891
    %v2935 = vpack.c.b16 %v2894, %v2893
    %v2936 = vpack.c.b16 %v2896, %v2895
    %v2937 = vpack.c.b16 %v2898, %v2897
    %v2938 = vpack.c.b16 %v2900, %v2899
    %v2939 = vpack.c.b16 %v2902, %v2901
    %v2940 = vpack.c.b16 %v2904, %v2903
    %v2941 = vpack.c.b16 %v2906, %v2905
    %v2942 = vpack.c.b16 %v2908, %v2907
    %v2943 = vpack.c.b16 %v2910, %v2909
    %v2944 = vpack.c.b16 %v2912, %v2911
    %v2945 = vpack.c.b16 %v2914, %v2913
    %v2946 = vpack.c.b16 %v2916, %v2915
    %v2947 = vpack.c.b16 %v2918, %v2917
    %v2948 = vpack.c.b16 %v2920, %v2919
    %v2949 = vpack.c.b16 %v2922, %v2921
    %v2950 = vpack.c.b16 %v2924, %v2923
    %v2951 = vpack.c.b16 %v2926, %v2925
    %v2978 = vsel %vm964, %v2769, 0
    %2980 = vmatprep.subr.bf16.mxu0 0
    %2981 = vmatpush1.bf16.msra.mxu0 %v2927
    %2982 = vmatprep.subr.bf16.mxu0 0
    %2983 = vmatpush1.bf16.msra.mxu0 %v2928
    %2984 = vmatprep.subr.bf16.mxu0 0
    %2985 = vmatpush1.bf16.msra.mxu0 %v2929
    %2986 = vmatprep.subr.bf16.mxu0 0
    %2987 = vmatpush1.bf16.msra.mxu0 %v2930
    %2988 = vmatprep.subr.bf16.mxu0 0
    %2989 = vmatpush1.bf16.msra.mxu0 %v2931
    %2990 = vmatprep.subr.bf16.mxu0 0
    %2991 = vmatpush1.bf16.msra.mxu0 %v2932
    %2992 = vmatprep.subr.bf16.mxu0 0
    %2993 = vmatpush1.bf16.msra.mxu0 %v2933
    %2994 = vmatprep.subr.bf16.mxu0 0
    %2995 = vmatpush1.bf16.msra.mxu0 %v2934
    %2996 = vmatprep.subr.bf16.mxu0 0
    %2997 = vmatpush1.bf16.msra.mxu0 %v2935
    %2998 = vmatprep.subr.bf16.mxu0 0
    %2999 = vmatpush1.bf16.msra.mxu0 %v2936
    %3000 = vmatprep.subr.bf16.mxu0 0
    %3001 = vmatpush1.bf16.msra.mxu0 %v2937
    %3002 = vmatprep.subr.bf16.mxu0 0
    %3003 = vmatpush1.bf16.msra.mxu0 %v2938
    %3004 = vmatprep.subr.bf16.mxu0 0
    %3005 = vmatpush1.bf16.msra.mxu0 %v2939
    %3006 = vmatprep.subr.bf16.mxu0 0
    %3007 = vmatpush1.bf16.msra.mxu0 %v2940
    %3008 = vmatprep.subr.bf16.mxu0 0
    %3009 = vmatpush1.bf16.msra.mxu0 %v2941
    %3010 = vmatprep.subr.bf16.mxu0 0
    %3011 = vmatpush1.bf16.msra.mxu0 %v2942
    %3012 = vmatprep.mubr.bf16.mxu0 %v2767
    %3013 = vmatmul.mubr.bf16.gmra.mrb[0].mxu0 %v2766
    %v3014 = vpop.f32.mrb[0].mxu0
    %v3015 = vadd.f32 %v2825, %v3014
    %v3016 = vpop.f32.mrb[0].mxu0
    %v3017 = vpop.f32.mrb[0].mxu0
    %v3018 = vadd.f32 %v2825, %v3017
    %v3019 = vpop.f32.mrb[0].mxu0
    %3020 = vdwg.mxu0
    %3021 = vmatprep.subr.bf16.mxu0 0
    %3022 = vmatpush1.bf16.msra.mxu0 %v2943
    %3023 = vmatprep.subr.bf16.mxu0 0
    %3024 = vmatpush1.bf16.msra.mxu0 %v2944
    %3025 = vmatprep.subr.bf16.mxu0 0
    %3026 = vmatpush1.bf16.msra.mxu0 %v2945
    %3027 = vmatprep.subr.bf16.mxu0 0
    %3028 = vmatpush1.bf16.msra.mxu0 %v2946
    %3029 = vmatprep.subr.bf16.mxu0 0
    %3030 = vmatpush1.bf16.msra.mxu0 %v2947
    %3031 = vmatprep.subr.bf16.mxu0 0
    %3032 = vmatpush1.bf16.msra.mxu0 %v2948
    %3033 = vmatprep.subr.bf16.mxu0 0
    %3034 = vmatpush1.bf16.msra.mxu0 %v2949
    %3035 = vmatprep.subr.bf16.mxu0 0
    %3036 = vmatpush1.bf16.msra.mxu0 %v2950
    %3037 = vmatprep.subr.bf16.mxu0 0
    %3038 = vmatpush1.bf16.msra.mxu0 %v2951
    %3039 = vmatprep.subr.bf16.mxu0 0
    %3040 = vmatpush1.bf16.msra.mxu0 0
    %3041 = vmatprep.subr.bf16.mxu0 0
    %3042 = vmatpush1.bf16.msra.mxu0 0
    %3043 = vmatprep.subr.bf16.mxu0 0
    %3044 = vmatpush1.bf16.msra.mxu0 0
    %3045 = vmatprep.subr.bf16.mxu0 0
    %3046 = vmatpush1.bf16.msra.mxu0 0
    %3047 = vmatprep.subr.bf16.mxu0 0
    %3048 = vmatpush1.bf16.msra.mxu0 0
    %3049 = vmatprep.subr.bf16.mxu0 0
    %3050 = vmatpush1.bf16.msra.mxu0 0
    %3051 = vmatprep.subr.bf16.mxu0 0
    %3052 = vmatpush1.bf16.msra.mxu0 0
    %3053 = vmatprep.mubr.bf16.mxu0 %v2978
    %3054 = vmatmul.mubr.bf16.gmra.mrb[0].mxu0 %v2768
    %v3055 = vpop.f32.mrb[0].mxu0
    %v3056 = vadd.f32 %v3015, %v3055
    %v3057 = vpop.f32.mrb[0].mxu0
    %v3058 = vpop.f32.mrb[0].mxu0
    %v3059 = vadd.f32 %v3018, %v3058
    %v3060 = vpop.f32.mrb[0].mxu0
    %3061 = vdwg.mxu0
    %vm3062 = vcmask 31744
    %3063 = vst.msk [vmem:[#allocation20] sm:$0xff] %vm3062, %v3056
    %3064 = vst.msk [vmem:[#allocation20 + $0x8] sm:$0xff] %vm3062, %v3059
    // Predicated region
    $region90: #{_mlp_forward_padded.1} parent=1 // pred_check
      _
    $region91: #{_mlp_forward_padded.1} parent=1 // pred_check_branch
      %3066 = sbr.rel (0) target = $region93
    $region92: #{_mlp_forward_padded.1} parent=1 // pred_region
      %s3068 = ssub.s32 256, 256
      %3069 = vsyncadd [#allocation4], %s3068
      %s3070 = sshll.u32 [#allocation20], 4
      %s3071 = int_to_ptr.vmem [resolvable:$true] %s3070
      %3076 = dma.vmem_to_hbm [thread:$0]  %s3071, 256, %s11, [#allocation4], 128, 128, 8
    $region93: #{_mlp_forward_padded.1} parent=1 // pred_fallthru
      _
    // Predicated region
    $region94: #{_mlp_forward_padded.1} parent=1 // pred_check
      _
    $region95: #{_mlp_forward_padded.1} parent=1 // pred_check_branch
      %3078 = sbr.rel (0) target = $region97
    $region96: #{_mlp_forward_padded.1} parent=1 // pred_region
      %3079 = dma.done [#allocation4], 256
    $region97: #{_mlp_forward_padded.1} parent=1 // pred_fallthru
      _
    %3080 = vsyncpa [#allocation3], 1
    %3081 = vsyncpa [#allocation6], 1
    %3082 = vsyncpa [#allocation9], 1
    %3083 = vsyncpa [#allocation12], 1
    %3084 = vsyncpa [#allocation15], 1
    %3085 = vsyncpa [#allocation18], 1
    %3086 = vsyncpa [#allocation4], 1

</llo_original>
